<compile_context>
chip_gen: v5e
topology: v5e:2x2
jax: 0.10.0
libtpu: 0.0.40
codegen_flags: <defaults>
</compile_context>

<pallas_src>
import functools

import jax
import jax.numpy as jnp
from jax.experimental import pallas as pl
from jax.experimental.pallas import tpu as pltpu

DIMS = [784, 392, 196, 98, 49, 10]           # PyTorch layer sizes
PAD_DIMS = [784, 512, 256, 128, 128, 128]    # 128-lane-aligned padded sizes
NUM_CLASSES = DIMS[-1]
OUT_PAD = PAD_DIMS[-1]
NEG = -1e30   # Python float (baked into padded b5; never captured by the kernel)


def _round_up(n, m):
    return ((n + m - 1) // m) * m


def mlp_kernel(x_ref,
               w1_ref, b1_ref,
               w2_ref, b2_ref,
               w3_ref, b3_ref,
               w4_ref, b4_ref,
               w5_ref, b5_ref,
               o_ref):
    """Fused forward pass for one batch tile.

    f32 input rows are cast to bf16 in-kernel, matmuls accumulate in f32 on
    the MXU, bias add / ReLU / log-softmax run on the VPU. Dropout (p=0.25)
    is identity (inference).
    """
    h = x_ref[...].astype(jnp.bfloat16)   # (block_b, 784)

    def layer(h, w_ref, b_ref):
        y = jnp.dot(h, w_ref[...], preferred_element_type=jnp.float32)
        y = y + b_ref[...]
        return jnp.maximum(y, 0.0).astype(jnp.bfloat16)

    h = layer(h, w1_ref, b1_ref)   # fc1 + relu1 (+ drop1 = identity)
    h = layer(h, w2_ref, b2_ref)   # fc12 + relu2 (+ drop2 = identity)
    h = layer(h, w3_ref, b3_ref)   # fc3 + relu3 (+ drop3 = identity)
    h = layer(h, w4_ref, b4_ref)   # fc4 + relu4

    # Output layer, padded to 128 lanes so the store is lane-dense. Padded W5
    # columns are zero and the padded b5 lanes carry -1e30, so padded logits
    # are already masked — no iota/where needed in the kernel.
    logits = jnp.dot(h, w5_ref[...], preferred_element_type=jnp.float32)
    logits = logits + b5_ref[...]

    # log_softmax(dim=1), numerically stable
    m = jnp.max(logits, axis=-1, keepdims=True)
    z = logits - m
    lse = jnp.log(jnp.sum(jnp.exp(z), axis=-1, keepdims=True))
    o_ref[...] = (z - lse).astype(o_ref.dtype)


def _pad_params(params):
    """Zero-pad each (W, b) to 128-aligned widths; cast W to bf16 (b stays f32,
    added after the f32 accumulate). Zero padding keeps the math exact through
    the ReLU layers. The last layer's padded bias lanes are set to -1e30 so
    padded logits never pollute the softmax normalizer."""
    padded = []
    last = len(params) - 1
    for i, (w, b) in enumerate(params):
        in_p, out_p = PAD_DIMS[i], PAD_DIMS[i + 1]
        wp = jnp.zeros((in_p, out_p), jnp.float32).at[:w.shape[0], :w.shape[1]].set(w)
        fill = NEG if i == last else 0.0
        bp = jnp.full((1, out_p), fill, jnp.float32).at[:, :b.shape[1]].set(b)
        padded.append((wp.astype(jnp.bfloat16), bp))
    return padded


@functools.partial(jax.jit, static_argnames=("block_b",))
def mlp_forward(x, params, block_b=None):
    """x: (B, 784) float32. params: list of (W_(in,out) f32, b_(1,out) f32).
    Returns (B, 10) float32 log-probabilities."""
    B, F = x.shape
    assert F == DIMS[0]

    if block_b is None:
        if B <= 128:
            # Small batch: one tile (sublane-rounded).
            block_b = max(8, _round_up(B, 8))
        else:
            # Even tile count (>=2) so the "parallel" batch axis balances
            # across both v7x TensorCores; block_b capped at ~1024 rows to
            # amortize per-step overhead while staying inside v7x's 64 MiB VMEM.
            n_tiles = max(2, _round_up(pl.cdiv(B, 1024), 2))
            block_b = _round_up(pl.cdiv(B, n_tiles), 16)

    grid = (pl.cdiv(B, block_b),)   # partial last block handled by Pallas

    padded = _pad_params(params)
    flat, weight_specs = [], []
    for w, b in padded:
        flat.extend([w, b])
        # Full-array blocks with grid-invariant index_maps: DMA'd once, stay
        # VMEM-resident across all batch tiles.
        weight_specs.append(pl.BlockSpec(w.shape, lambda i: (0, 0)))
        weight_specs.append(pl.BlockSpec(b.shape, lambda i: (0, 0)))

    out = pl.pallas_call(
        mlp_kernel,
        out_shape=jax.ShapeDtypeStruct((B, OUT_PAD), jnp.float32),
        grid_spec=pltpu.PrefetchScalarGridSpec(
            num_scalar_prefetch=0,
            grid=grid,
            in_specs=[pl.BlockSpec((block_b, DIMS[0]), lambda i: (i, 0))]
                     + weight_specs,
            out_specs=pl.BlockSpec((block_b, OUT_PAD), lambda i: (i, 0)),
        ),
        compiler_params=pltpu.CompilerParams(
            dimension_semantics=("parallel",),
            vmem_limit_bytes=48 * 1024 * 1024,
        ),
    )(x, *flat)

    # Drop padded class lanes (batch rows already exact: out_shape is (B, 128)).
    return out[:, :NUM_CLASSES]


def init_params(key):
    """Matches the PyTorch module's custom init: W ~ Normal(0, sqrt(2/(fan_in +
    fan_out))); biases use PyTorch Linear default U(-1/sqrt(fan_in), ...)."""
    params = []
    for fan_in, fan_out in zip(DIMS[:-1], DIMS[1:]):
        key, kw, kb = jax.random.split(key, 3)
        std = jnp.sqrt(2.0 / (fan_in + fan_out))
        # Stored as (in, out): PyTorch's (out, in) weight, transposed.
        w = std * jax.random.normal(kw, (fan_in, fan_out), dtype=jnp.float32)
        bound = 1.0 / jnp.sqrt(jnp.float32(fan_in))
        b = jax.random.uniform(kb, (1, fan_out), dtype=jnp.float32,
                               minval=-bound, maxval=bound)
        params.append((w, b))
    return params


def reference_forward(x, params):
    """Pure-JAX reference mirroring the kernel's bf16-input / f32-accumulate
    matmul precision (so the comparison isolates kernel bugs, not dtype)."""
    h = x.astype(jnp.bfloat16)
    for i, (w, b) in enumerate(params):
        h = jnp.dot(h, w.astype(jnp.bfloat16),
                    preferred_element_type=jnp.float32) + b
        if i < len(params) - 1:
            h = jnp.maximum(h, 0.0).astype(jnp.bfloat16)
    return jax.nn.log_softmax(h, axis=-1)


if __name__ == "__main__":
    key = jax.random.PRNGKey(0)
    key, kx = jax.random.split(key)

    B = 8
    # forward() does x.view(B, -1): any (B, 1, 28, 28) input flattens to (B, 784).
    x_img = jax.random.normal(kx, (B, 1, 28, 28), dtype=jnp.float32)
    x = x_img.reshape(B, -1)

    params = init_params(key)

    out = mlp_forward(x, params)
    out = jax.block_until_ready(out)
    ref = reference_forward(x, params)

    assert out.shape == (B, 10), out.shape
    assert jnp.allclose(out, ref, atol=1e-2, rtol=1e-2), "mismatch vs reference"
    # log-softmax rows should sum (in prob space) to ~1
    assert jnp.allclose(jnp.sum(jnp.exp(out), axis=-1), 1.0, atol=1e-3)

    # Exercise the partial-last-block path (B not a multiple of the tile).
    B2 = 10
    key, kx2 = jax.random.split(key)
    x2 = jax.random.normal(kx2, (B2, 784), dtype=jnp.float32)
    out2 = jax.block_until_ready(mlp_forward(x2, params))
    ref2 = reference_forward(x2, params)
    assert out2.shape == (B2, 10)
    assert jnp.allclose(out2, ref2, atol=1e-2, rtol=1e-2), "mismatch (partial block)"

    # Exercise the multi-tile (2 'parallel' grid steps) path.
    B3 = 144
    key, kx3 = jax.random.split(key)
    x3 = jax.random.normal(kx3, (B3, 784), dtype=jnp.float32)
    out3 = jax.block_until_ready(mlp_forward(x3, params))
    ref3 = reference_forward(x3, params)
    assert out3.shape == (B3, 10)
    assert jnp.allclose(out3, ref3, atol=1e-2, rtol=1e-2), "mismatch (multi-tile)"

    print("KERNEL_OK")
</pallas_src>

<mosaic_0001>
module attributes {stable_mosaic.version = 11 : i64} {
  func.func @mlp_kernel(%arg0: i32, %arg1: memref<8x784xf32, #tpu.memory_space<vmem>>, %arg2: memref<784x512xbf16, #tpu.memory_space<vmem>>, %arg3: memref<1x512xf32, #tpu.memory_space<vmem>>, %arg4: memref<512x256xbf16, #tpu.memory_space<vmem>>, %arg5: memref<1x256xf32, #tpu.memory_space<vmem>>, %arg6: memref<256x128xbf16, #tpu.memory_space<vmem>>, %arg7: memref<1x128xf32, #tpu.memory_space<vmem>>, %arg8: memref<128x128xbf16, #tpu.memory_space<vmem>>, %arg9: memref<1x128xf32, #tpu.memory_space<vmem>>, %arg10: memref<128x128xbf16, #tpu.memory_space<vmem>>, %arg11: memref<1x128xf32, #tpu.memory_space<vmem>>, %arg12: memref<8x128xf32, #tpu.memory_space<vmem>>) attributes {dimension_semantics = [#tpu.dimension_semantics<parallel>], iteration_bounds = array<i64: 1>, scalar_prefetch = 0 : i64, scratch_operands = 0 : i64, tpu.core_type = #tpu.core_type<tc>, window_params = [{transform_indices = @transform_0, window_bounds = array<i64: 8, 784>}, {pipeline_mode = #tpu.pipeline_mode<synchronous>, transform_indices = @transform_1, window_bounds = array<i64: 784, 512>}, {pipeline_mode = #tpu.pipeline_mode<synchronous>, transform_indices = @transform_2, window_bounds = array<i64: 1, 512>}, {pipeline_mode = #tpu.pipeline_mode<synchronous>, transform_indices = @transform_3, window_bounds = array<i64: 512, 256>}, {pipeline_mode = #tpu.pipeline_mode<synchronous>, transform_indices = @transform_4, window_bounds = array<i64: 1, 256>}, {pipeline_mode = #tpu.pipeline_mode<synchronous>, transform_indices = @transform_5, window_bounds = array<i64: 256, 128>}, {pipeline_mode = #tpu.pipeline_mode<synchronous>, transform_indices = @transform_6, window_bounds = array<i64: 1, 128>}, {pipeline_mode = #tpu.pipeline_mode<synchronous>, transform_indices = @transform_7, window_bounds = array<i64: 128, 128>}, {pipeline_mode = #tpu.pipeline_mode<synchronous>, transform_indices = @transform_8, window_bounds = array<i64: 1, 128>}, {pipeline_mode = #tpu.pipeline_mode<synchronous>, transform_indices = @transform_9, window_bounds = array<i64: 128, 128>}, {pipeline_mode = #tpu.pipeline_mode<synchronous>, transform_indices = @transform_10, window_bounds = array<i64: 1, 128>}, {transform_indices = @transform_11, window_bounds = array<i64: 8, 128>}]} {
    %c0 = arith.constant 0 : index
    %c0_0 = arith.constant 0 : index
    %0 = vector.load %arg1[%c0, %c0_0] : memref<8x784xf32, #tpu.memory_space<vmem>>, vector<8x784xf32>
    %1 = arith.truncf %0 : vector<8x784xf32> to vector<8x784xbf16>
    %c0_1 = arith.constant 0 : index
    %c0_2 = arith.constant 0 : index
    %2 = vector.load %arg2[%c0_1, %c0_2] : memref<784x512xbf16, #tpu.memory_space<vmem>>, vector<784x512xbf16>
    %cst = arith.constant dense<0.000000e+00> : vector<8x512xf32>
    %3 = tpu.matmul %1, %2, %cst {dimension_numbers = #tpu.dot_dimension_numbers<[1], [0], [0], [1], [0, 0, 1, 1], [], []>} : vector<8x784xbf16>, vector<784x512xbf16>, vector<8x512xf32> -> vector<8x512xf32>
    %c0_3 = arith.constant 0 : index
    %c0_4 = arith.constant 0 : index
    %4 = vector.load %arg3[%c0_3, %c0_4] : memref<1x512xf32, #tpu.memory_space<vmem>>, vector<1x512xf32>
    %5 = vector.broadcast %4 : vector<1x512xf32> to vector<8x512xf32>
    %6 = arith.addf %3, %5 : vector<8x512xf32>
    %cst_5 = arith.constant 0.000000e+00 : f32
    %7 = vector.broadcast %cst_5 : f32 to vector<8x512xf32>
    %8 = arith.maximumf %6, %7 : vector<8x512xf32>
    %9 = arith.truncf %8 : vector<8x512xf32> to vector<8x512xbf16>
    %c0_6 = arith.constant 0 : index
    %c0_7 = arith.constant 0 : index
    %10 = vector.load %arg4[%c0_6, %c0_7] : memref<512x256xbf16, #tpu.memory_space<vmem>>, vector<512x256xbf16>
    %cst_8 = arith.constant dense<0.000000e+00> : vector<8x256xf32>
    %11 = tpu.matmul %9, %10, %cst_8 {dimension_numbers = #tpu.dot_dimension_numbers<[1], [0], [0], [1], [0, 0, 1, 1], [], []>} : vector<8x512xbf16>, vector<512x256xbf16>, vector<8x256xf32> -> vector<8x256xf32>
    %c0_9 = arith.constant 0 : index
    %c0_10 = arith.constant 0 : index
    %12 = vector.load %arg5[%c0_9, %c0_10] : memref<1x256xf32, #tpu.memory_space<vmem>>, vector<1x256xf32>
    %13 = vector.broadcast %12 : vector<1x256xf32> to vector<8x256xf32>
    %14 = arith.addf %11, %13 : vector<8x256xf32>
    %cst_11 = arith.constant 0.000000e+00 : f32
    %15 = vector.broadcast %cst_11 : f32 to vector<8x256xf32>
    %16 = arith.maximumf %14, %15 : vector<8x256xf32>
    %17 = arith.truncf %16 : vector<8x256xf32> to vector<8x256xbf16>
    %c0_12 = arith.constant 0 : index
    %c0_13 = arith.constant 0 : index
    %18 = vector.load %arg6[%c0_12, %c0_13] : memref<256x128xbf16, #tpu.memory_space<vmem>>, vector<256x128xbf16>
    %cst_14 = arith.constant dense<0.000000e+00> : vector<8x128xf32>
    %19 = tpu.matmul %17, %18, %cst_14 {dimension_numbers = #tpu.dot_dimension_numbers<[1], [0], [0], [1], [0, 0, 1, 1], [], []>} : vector<8x256xbf16>, vector<256x128xbf16>, vector<8x128xf32> -> vector<8x128xf32>
    %c0_15 = arith.constant 0 : index
    %c0_16 = arith.constant 0 : index
    %20 = vector.load %arg7[%c0_15, %c0_16] : memref<1x128xf32, #tpu.memory_space<vmem>>, vector<1x128xf32>
    %21 = vector.broadcast %20 : vector<1x128xf32> to vector<8x128xf32>
    %22 = arith.addf %19, %21 : vector<8x128xf32>
    %cst_17 = arith.constant 0.000000e+00 : f32
    %23 = vector.broadcast %cst_17 : f32 to vector<8x128xf32>
    %24 = arith.maximumf %22, %23 : vector<8x128xf32>
    %25 = arith.truncf %24 : vector<8x128xf32> to vector<8x128xbf16>
    %c0_18 = arith.constant 0 : index
    %c0_19 = arith.constant 0 : index
    %26 = vector.load %arg8[%c0_18, %c0_19] : memref<128x128xbf16, #tpu.memory_space<vmem>>, vector<128x128xbf16>
    %cst_20 = arith.constant dense<0.000000e+00> : vector<8x128xf32>
    %27 = tpu.matmul %25, %26, %cst_20 {dimension_numbers = #tpu.dot_dimension_numbers<[1], [0], [0], [1], [0, 0, 1, 1], [], []>} : vector<8x128xbf16>, vector<128x128xbf16>, vector<8x128xf32> -> vector<8x128xf32>
    %c0_21 = arith.constant 0 : index
    %c0_22 = arith.constant 0 : index
    %28 = vector.load %arg9[%c0_21, %c0_22] : memref<1x128xf32, #tpu.memory_space<vmem>>, vector<1x128xf32>
    %29 = vector.broadcast %28 : vector<1x128xf32> to vector<8x128xf32>
    %30 = arith.addf %27, %29 : vector<8x128xf32>
    %cst_23 = arith.constant 0.000000e+00 : f32
    %31 = vector.broadcast %cst_23 : f32 to vector<8x128xf32>
    %32 = arith.maximumf %30, %31 : vector<8x128xf32>
    %33 = arith.truncf %32 : vector<8x128xf32> to vector<8x128xbf16>
    %c0_24 = arith.constant 0 : index
    %c0_25 = arith.constant 0 : index
    %34 = vector.load %arg10[%c0_24, %c0_25] : memref<128x128xbf16, #tpu.memory_space<vmem>>, vector<128x128xbf16>
    %cst_26 = arith.constant dense<0.000000e+00> : vector<8x128xf32>
    %35 = tpu.matmul %33, %34, %cst_26 {dimension_numbers = #tpu.dot_dimension_numbers<[1], [0], [0], [1], [0, 0, 1, 1], [], []>} : vector<8x128xbf16>, vector<128x128xbf16>, vector<8x128xf32> -> vector<8x128xf32>
    %c0_27 = arith.constant 0 : index
    %c0_28 = arith.constant 0 : index
    %36 = vector.load %arg11[%c0_27, %c0_28] : memref<1x128xf32, #tpu.memory_space<vmem>>, vector<1x128xf32>
    %37 = vector.broadcast %36 : vector<1x128xf32> to vector<8x128xf32>
    %38 = arith.addf %35, %37 : vector<8x128xf32>
    %cst_29 = arith.constant dense<0xFF800000> : vector<8xf32>
    %39 = vector.multi_reduction <maximumf>, %38, %cst_29 [1] : vector<8x128xf32> to vector<8xf32>
    %40 = vector.shape_cast %39 : vector<8xf32> to vector<8x1xf32>
    %41 = vector.broadcast %40 : vector<8x1xf32> to vector<8x128xf32>
    %42 = arith.subf %38, %41 : vector<8x128xf32>
    %43 = math.exp %42 : vector<8x128xf32>
    %cst_30 = arith.constant dense<0.000000e+00> : vector<8xf32>
    %44 = vector.multi_reduction <add>, %43, %cst_30 [1] : vector<8x128xf32> to vector<8xf32>
    %45 = vector.shape_cast %44 : vector<8xf32> to vector<8x1xf32>
    %46 = math.log %45 : vector<8x1xf32>
    %47 = vector.broadcast %46 : vector<8x1xf32> to vector<8x128xf32>
    %48 = arith.subf %42, %47 : vector<8x128xf32>
    %c0_31 = arith.constant 0 : index
    %c0_32 = arith.constant 0 : index
    %49 = vector.load %arg12[%c0_31, %c0_32] : memref<8x128xf32, #tpu.memory_space<vmem>>, vector<8x128xf32>
    tpu.vector_store %arg12[%c0_31, %c0_32], %48 {strides = array<i32>} : memref<8x128xf32, #tpu.memory_space<vmem>>, vector<8x128xf32>,
    return
  }
  func.func @transform_0(%arg0: i32) -> (i32, i32) {
    %c0_i32 = arith.constant 0 : i32
    %c0_i32_0 = arith.constant 0 : i32
    return %arg0, %c0_i32 : i32, i32
  }
  func.func @transform_1(%arg0: i32) -> (i32, i32) {
    %c0_i32 = arith.constant 0 : i32
    %c0_i32_0 = arith.constant 0 : i32
    %c0_i32_1 = arith.constant 0 : i32
    return %c0_i32, %c0_i32_0 : i32, i32
  }
  func.func @transform_2(%arg0: i32) -> (i32, i32) {
    %c0_i32 = arith.constant 0 : i32
    %c0_i32_0 = arith.constant 0 : i32
    %c0_i32_1 = arith.constant 0 : i32
    return %c0_i32, %c0_i32_0 : i32, i32
  }
  func.func @transform_3(%arg0: i32) -> (i32, i32) {
    %c0_i32 = arith.constant 0 : i32
    %c0_i32_0 = arith.constant 0 : i32
    %c0_i32_1 = arith.constant 0 : i32
    return %c0_i32, %c0_i32_0 : i32, i32
  }
  func.func @transform_4(%arg0: i32) -> (i32, i32) {
    %c0_i32 = arith.constant 0 : i32
    %c0_i32_0 = arith.constant 0 : i32
    %c0_i32_1 = arith.constant 0 : i32
    return %c0_i32, %c0_i32_0 : i32, i32
  }
  func.func @transform_5(%arg0: i32) -> (i32, i32) {
    %c0_i32 = arith.constant 0 : i32
    %c0_i32_0 = arith.constant 0 : i32
    %c0_i32_1 = arith.constant 0 : i32
    return %c0_i32, %c0_i32_0 : i32, i32
  }
  func.func @transform_6(%arg0: i32) -> (i32, i32) {
    %c0_i32 = arith.constant 0 : i32
    %c0_i32_0 = arith.constant 0 : i32
    %c0_i32_1 = arith.constant 0 : i32
    return %c0_i32, %c0_i32_0 : i32, i32
  }
  func.func @transform_7(%arg0: i32) -> (i32, i32) {
    %c0_i32 = arith.constant 0 : i32
    %c0_i32_0 = arith.constant 0 : i32
    %c0_i32_1 = arith.constant 0 : i32
    return %c0_i32, %c0_i32_0 : i32, i32
  }
  func.func @transform_8(%arg0: i32) -> (i32, i32) {
    %c0_i32 = arith.constant 0 : i32
    %c0_i32_0 = arith.constant 0 : i32
    %c0_i32_1 = arith.constant 0 : i32
    return %c0_i32, %c0_i32_0 : i32, i32
  }
  func.func @transform_9(%arg0: i32) -> (i32, i32) {
    %c0_i32 = arith.constant 0 : i32
    %c0_i32_0 = arith.constant 0 : i32
    %c0_i32_1 = arith.constant 0 : i32
    return %c0_i32, %c0_i32_0 : i32, i32
  }
  func.func @transform_10(%arg0: i32) -> (i32, i32) {
    %c0_i32 = arith.constant 0 : i32
    %c0_i32_0 = arith.constant 0 : i32
    %c0_i32_1 = arith.constant 0 : i32
    return %c0_i32, %c0_i32_0 : i32, i32
  }
  func.func @transform_11(%arg0: i32) -> (i32, i32) {
    %c0_i32 = arith.constant 0 : i32
    %c0_i32_0 = arith.constant 0 : i32
    return %arg0, %c0_i32 : i32, i32
  }
}

</mosaic_0001>

<llo_original>
// kernel: mlp_forward.1
$region0: #{mlp_forward.1}
  #allocation0 [shape = 'u32[]', space=smem, size = 0x4, offset = 0x4, fixed_abs, tag = 'smem constant byte address 0x4 - core index']
  #allocation1 [shape = 'u32[72,128]{1,0:T(1,128)}', space=vmem, size = 0x9000, scoped, tag = 'internal scratch']
  %s0 = inlined_call_operand.vmem [shape: f32[8,784], index: 0, kind: input, shape index: {}]
  %s1 = inlined_call_operand.vmem [shape: bf16[784,512], index: 1, kind: input, shape index: {}]
  %s2 = inlined_call_operand.vmem [shape: f32[1,512], index: 2, kind: input, shape index: {}]
  %s3 = inlined_call_operand.vmem [shape: bf16[512,256], index: 3, kind: input, shape index: {}]
  %s4 = inlined_call_operand.vmem [shape: f32[1,256], index: 4, kind: input, shape index: {}]
  %s5 = inlined_call_operand.vmem [shape: bf16[256,128], index: 5, kind: input, shape index: {}]
  %s6 = inlined_call_operand.vmem [shape: f32[1,128], index: 6, kind: input, shape index: {}]
  %s7 = inlined_call_operand.vmem [shape: bf16[128,128], index: 7, kind: input, shape index: {}]
  %s8 = inlined_call_operand.vmem [shape: f32[1,128], index: 8, kind: input, shape index: {}]
  %s9 = inlined_call_operand.vmem [shape: bf16[128,128], index: 9, kind: input, shape index: {}]
  %s10 = inlined_call_operand.vmem [shape: f32[1,128], index: 10, kind: input, shape index: {}]
  %s11 = inlined_call_operand.hbm [shape: f32[8,128], index: 11, kind: output, shape index: {}]
  %s12 = sld [smem:[#allocation0]]
  $region54: #{mlp_forward.1} parent=0
    _
  %s14 = ssub.s32 1, %s12
  %s15 = scalar_select 0, %s14, %s12
  $region1: #{mlp_forward.1} parent=0
    #allocation2 [shape = 'u8[4096]{0}', space=vmem, size = 0x1000, scoped, tag = 'output window, operand 0, single buffered']
    #allocation3 [shape = 's32[1]{0}', space=sflag, size = 0x4, scoped, tag = 'scoped memory for mlp_forward.1']
    %16 = vsyncpa [#allocation3], 0
    // Predicated region
    $region2: #{mlp_forward.1} parent=1 // pred_check
      _
    $region3: #{mlp_forward.1} parent=1 // pred_check_branch
      %18 = sbr.rel (0) target = $region5
    $region4: #{mlp_forward.1} parent=1 // pred_region
      _
    $region5: #{mlp_forward.1} parent=1 // pred_fallthru
      _
    // Predicated region
    $region6: #{mlp_forward.1} parent=1 // pred_check
      _
    $region7: #{mlp_forward.1} parent=1 // pred_check_branch
      %20 = sbr.rel (0) target = $region9
    $region8: #{mlp_forward.1} parent=1 // pred_region
      _
    $region9: #{mlp_forward.1} parent=1 // pred_fallthru
      _
    // Predicated region
    $region10: #{mlp_forward.1} parent=1 // pred_check
      _
    $region11: #{mlp_forward.1} parent=1 // pred_check_branch
      %22 = sbr.rel (0) target = $region13
    $region12: #{mlp_forward.1} parent=1 // pred_region
      _
    $region13: #{mlp_forward.1} parent=1 // pred_fallthru
      _
    // Predicated region
    $region14: #{mlp_forward.1} parent=1 // pred_check
      _
    $region15: #{mlp_forward.1} parent=1 // pred_check_branch
      %24 = sbr.rel (0) target = $region17
    $region16: #{mlp_forward.1} parent=1 // pred_region
      _
    $region17: #{mlp_forward.1} parent=1 // pred_fallthru
      _
    // Predicated region
    $region18: #{mlp_forward.1} parent=1 // pred_check
      _
    $region19: #{mlp_forward.1} parent=1 // pred_check_branch
      %26 = sbr.rel (0) target = $region21
    $region20: #{mlp_forward.1} parent=1 // pred_region
      _
    $region21: #{mlp_forward.1} parent=1 // pred_fallthru
      _
    // Predicated region
    $region22: #{mlp_forward.1} parent=1 // pred_check
      _
    $region23: #{mlp_forward.1} parent=1 // pred_check_branch
      %28 = sbr.rel (0) target = $region25
    $region24: #{mlp_forward.1} parent=1 // pred_region
      _
    $region25: #{mlp_forward.1} parent=1 // pred_fallthru
      _
    // Predicated region
    $region26: #{mlp_forward.1} parent=1 // pred_check
      _
    $region27: #{mlp_forward.1} parent=1 // pred_check_branch
      %30 = sbr.rel (0) target = $region29
    $region28: #{mlp_forward.1} parent=1 // pred_region
      _
    $region29: #{mlp_forward.1} parent=1 // pred_fallthru
      _
    // Predicated region
    $region30: #{mlp_forward.1} parent=1 // pred_check
      _
    $region31: #{mlp_forward.1} parent=1 // pred_check_branch
      %32 = sbr.rel (0) target = $region33
    $region32: #{mlp_forward.1} parent=1 // pred_region
      _
    $region33: #{mlp_forward.1} parent=1 // pred_fallthru
      _
    // Predicated region
    $region34: #{mlp_forward.1} parent=1 // pred_check
      _
    $region35: #{mlp_forward.1} parent=1 // pred_check_branch
      %34 = sbr.rel (0) target = $region37
    $region36: #{mlp_forward.1} parent=1 // pred_region
      _
    $region37: #{mlp_forward.1} parent=1 // pred_fallthru
      _
    // Predicated region
    $region38: #{mlp_forward.1} parent=1 // pred_check
      _
    $region39: #{mlp_forward.1} parent=1 // pred_check_branch
      %36 = sbr.rel (0) target = $region41
    $region40: #{mlp_forward.1} parent=1 // pred_region
      _
    $region41: #{mlp_forward.1} parent=1 // pred_fallthru
      _
    // Predicated region
    $region42: #{mlp_forward.1} parent=1 // pred_check
      _
    $region43: #{mlp_forward.1} parent=1 // pred_check_branch
      %38 = sbr.rel (0) target = $region45
    $region44: #{mlp_forward.1} parent=1 // pred_region
      _
    $region45: #{mlp_forward.1} parent=1 // pred_fallthru
      _
    %v40 = vld [vmem:[%s0] sm:$0xff]
    %v41 = vld [vmem:[%s0 + $0x8] sm:$0xff]
    %v42 = vld [vmem:[%s0 + $0x10] sm:$0xff]
    %v43 = vld [vmem:[%s0 + $0x18] sm:$0xff]
    %v44 = vld [vmem:[%s0 + $0x20] sm:$0xff]
    %v45 = vld [vmem:[%s0 + $0x28] sm:$0xff]
    %v46 = vld [vmem:[%s0 + $0x30] sm:$0xff]
    %v47 = vpack.c.bf16 %v40, %v40
    %v48 = vpack.c.bf16 %v41, %v41
    %v49 = vpack.c.bf16 %v42, %v42
    %v50 = vpack.c.bf16 %v43, %v43
    %v51 = vpack.c.bf16 %v44, %v44
    %v52 = vpack.c.bf16 %v45, %v45
    %v53 = vpack.c.bf16 %v46, %v46
    %v54 = vld [vmem:[%s1] sm:$0xff]
    %v55 = vld [vmem:[%s1 + $0x8] sm:$0xff]
    %v56 = vld [vmem:[%s1 + $0x10] sm:$0xff]
    %v57 = vld [vmem:[%s1 + $0x18] sm:$0xff]
    %v58 = vld [vmem:[%s1 + $0x20] sm:$0xff]
    %v59 = vld [vmem:[%s1 + $0x28] sm:$0xff]
    %v60 = vld [vmem:[%s1 + $0x30] sm:$0xff]
    %v61 = vld [vmem:[%s1 + $0x38] sm:$0xff]
    %v62 = vld [vmem:[%s1 + $0x40] sm:$0xff]
    %v63 = vld [vmem:[%s1 + $0x48] sm:$0xff]
    %v64 = vld [vmem:[%s1 + $0x50] sm:$0xff]
    %v65 = vld [vmem:[%s1 + $0x58] sm:$0xff]
    %v66 = vld [vmem:[%s1 + $0x60] sm:$0xff]
    %v67 = vld [vmem:[%s1 + $0x68] sm:$0xff]
    %v68 = vld [vmem:[%s1 + $0x70] sm:$0xff]
    %v69 = vld [vmem:[%s1 + $0x78] sm:$0xff]
    %v70 = vld [vmem:[%s1 + $0x80] sm:$0xff]
    %v71 = vld [vmem:[%s1 + $0x88] sm:$0xff]
    %v72 = vld [vmem:[%s1 + $0x90] sm:$0xff]
    %v73 = vld [vmem:[%s1 + $0x98] sm:$0xff]
    %v74 = vld [vmem:[%s1 + $0xa0] sm:$0xff]
    %v75 = vld [vmem:[%s1 + $0xa8] sm:$0xff]
    %v76 = vld [vmem:[%s1 + $0xb0] sm:$0xff]
    %v77 = vld [vmem:[%s1 + $0xb8] sm:$0xff]
    %v78 = vld [vmem:[%s1 + $0xc0] sm:$0xff]
    %v79 = vld [vmem:[%s1 + $0xc8] sm:$0xff]
    %v80 = vld [vmem:[%s1 + $0xd0] sm:$0xff]
    %v81 = vld [vmem:[%s1 + $0xd8] sm:$0xff]
    %v82 = vld [vmem:[%s1 + $0xe0] sm:$0xff]
    %v83 = vld [vmem:[%s1 + $0xe8] sm:$0xff]
    %v84 = vld [vmem:[%s1 + $0xf0] sm:$0xff]
    %v85 = vld [vmem:[%s1 + $0xf8] sm:$0xff]
    %v86 = vld [vmem:[%s1 + $0x100] sm:$0xff]
    %v87 = vld [vmem:[%s1 + $0x108] sm:$0xff]
    %v88 = vld [vmem:[%s1 + $0x110] sm:$0xff]
    %v89 = vld [vmem:[%s1 + $0x118] sm:$0xff]
    %v90 = vld [vmem:[%s1 + $0x120] sm:$0xff]
    %v91 = vld [vmem:[%s1 + $0x128] sm:$0xff]
    %v92 = vld [vmem:[%s1 + $0x130] sm:$0xff]
    %v93 = vld [vmem:[%s1 + $0x138] sm:$0xff]
    %v94 = vld [vmem:[%s1 + $0x140] sm:$0xff]
    %v95 = vld [vmem:[%s1 + $0x148] sm:$0xff]
    %v96 = vld [vmem:[%s1 + $0x150] sm:$0xff]
    %v97 = vld [vmem:[%s1 + $0x158] sm:$0xff]
    %v98 = vld [vmem:[%s1 + $0x160] sm:$0xff]
    %v99 = vld [vmem:[%s1 + $0x168] sm:$0xff]
    %v100 = vld [vmem:[%s1 + $0x170] sm:$0xff]
    %v101 = vld [vmem:[%s1 + $0x178] sm:$0xff]
    %v102 = vld [vmem:[%s1 + $0x180] sm:$0xff]
    %v103 = vld [vmem:[%s1 + $0x188] sm:$0xff]
    %v104 = vld [vmem:[%s1 + $0x190] sm:$0xff]
    %v105 = vld [vmem:[%s1 + $0x198] sm:$0xff]
    %v106 = vld [vmem:[%s1 + $0x1a0] sm:$0xff]
    %v107 = vld [vmem:[%s1 + $0x1a8] sm:$0xff]
    %v108 = vld [vmem:[%s1 + $0x1b0] sm:$0xff]
    %v109 = vld [vmem:[%s1 + $0x1b8] sm:$0xff]
    %v110 = vld [vmem:[%s1 + $0x1c0] sm:$0xff]
    %v111 = vld [vmem:[%s1 + $0x1c8] sm:$0xff]
    %v112 = vld [vmem:[%s1 + $0x1d0] sm:$0xff]
    %v113 = vld [vmem:[%s1 + $0x1d8] sm:$0xff]
    %v114 = vld [vmem:[%s1 + $0x1e0] sm:$0xff]
    %v115 = vld [vmem:[%s1 + $0x1e8] sm:$0xff]
    %v116 = vld [vmem:[%s1 + $0x1f0] sm:$0xff]
    %v117 = vld [vmem:[%s1 + $0x1f8] sm:$0xff]
    %v118 = vld [vmem:[%s1 + $0x200] sm:$0xff]
    %v119 = vld [vmem:[%s1 + $0x208] sm:$0xff]
    %v120 = vld [vmem:[%s1 + $0x210] sm:$0xff]
    %v121 = vld [vmem:[%s1 + $0x218] sm:$0xff]
    %v122 = vld [vmem:[%s1 + $0x220] sm:$0xff]
    %v123 = vld [vmem:[%s1 + $0x228] sm:$0xff]
    %v124 = vld [vmem:[%s1 + $0x230] sm:$0xff]
    %v125 = vld [vmem:[%s1 + $0x238] sm:$0xff]
    %v126 = vld [vmem:[%s1 + $0x240] sm:$0xff]
    %v127 = vld [vmem:[%s1 + $0x248] sm:$0xff]
    %v128 = vld [vmem:[%s1 + $0x250] sm:$0xff]
    %v129 = vld [vmem:[%s1 + $0x258] sm:$0xff]
    %v130 = vld [vmem:[%s1 + $0x260] sm:$0xff]
    %v131 = vld [vmem:[%s1 + $0x268] sm:$0xff]
    %v132 = vld [vmem:[%s1 + $0x270] sm:$0xff]
    %v133 = vld [vmem:[%s1 + $0x278] sm:$0xff]
    %v134 = vld [vmem:[%s1 + $0x280] sm:$0xff]
    %v135 = vld [vmem:[%s1 + $0x288] sm:$0xff]
    %v136 = vld [vmem:[%s1 + $0x290] sm:$0xff]
    %v137 = vld [vmem:[%s1 + $0x298] sm:$0xff]
    %v138 = vld [vmem:[%s1 + $0x2a0] sm:$0xff]
    %v139 = vld [vmem:[%s1 + $0x2a8] sm:$0xff]
    %v140 = vld [vmem:[%s1 + $0x2b0] sm:$0xff]
    %v141 = vld [vmem:[%s1 + $0x2b8] sm:$0xff]
    %v142 = vld [vmem:[%s1 + $0x2c0] sm:$0xff]
    %v143 = vld [vmem:[%s1 + $0x2c8] sm:$0xff]
    %v144 = vld [vmem:[%s1 + $0x2d0] sm:$0xff]
    %v145 = vld [vmem:[%s1 + $0x2d8] sm:$0xff]
    %v146 = vld [vmem:[%s1 + $0x2e0] sm:$0xff]
    %v147 = vld [vmem:[%s1 + $0x2e8] sm:$0xff]
    %v148 = vld [vmem:[%s1 + $0x2f0] sm:$0xff]
    %v149 = vld [vmem:[%s1 + $0x2f8] sm:$0xff]
    %v150 = vld [vmem:[%s1 + $0x300] sm:$0xff]
    %v151 = vld [vmem:[%s1 + $0x308] sm:$0xff]
    %v152 = vld [vmem:[%s1 + $0x310] sm:$0xff]
    %v153 = vld [vmem:[%s1 + $0x318] sm:$0xff]
    %v154 = vld [vmem:[%s1 + $0x320] sm:$0xff]
    %v155 = vld [vmem:[%s1 + $0x328] sm:$0xff]
    %v156 = vld [vmem:[%s1 + $0x330] sm:$0xff]
    %v157 = vld [vmem:[%s1 + $0x338] sm:$0xff]
    %v158 = vld [vmem:[%s1 + $0x340] sm:$0xff]
    %v159 = vld [vmem:[%s1 + $0x348] sm:$0xff]
    %v160 = vld [vmem:[%s1 + $0x350] sm:$0xff]
    %v161 = vld [vmem:[%s1 + $0x358] sm:$0xff]
    %v162 = vld [vmem:[%s1 + $0x360] sm:$0xff]
    %v163 = vld [vmem:[%s1 + $0x368] sm:$0xff]
    %v164 = vld [vmem:[%s1 + $0x370] sm:$0xff]
    %v165 = vld [vmem:[%s1 + $0x378] sm:$0xff]
    %v166 = vld [vmem:[%s1 + $0x380] sm:$0xff]
    %v167 = vld [vmem:[%s1 + $0x388] sm:$0xff]
    %v168 = vld [vmem:[%s1 + $0x390] sm:$0xff]
    %v169 = vld [vmem:[%s1 + $0x398] sm:$0xff]
    %v170 = vld [vmem:[%s1 + $0x3a0] sm:$0xff]
    %v171 = vld [vmem:[%s1 + $0x3a8] sm:$0xff]
    %v172 = vld [vmem:[%s1 + $0x3b0] sm:$0xff]
    %v173 = vld [vmem:[%s1 + $0x3b8] sm:$0xff]
    %v174 = vld [vmem:[%s1 + $0x3c0] sm:$0xff]
    %v175 = vld [vmem:[%s1 + $0x3c8] sm:$0xff]
    %v176 = vld [vmem:[%s1 + $0x3d0] sm:$0xff]
    %v177 = vld [vmem:[%s1 + $0x3d8] sm:$0xff]
    %v178 = vld [vmem:[%s1 + $0x3e0] sm:$0xff]
    %v179 = vld [vmem:[%s1 + $0x3e8] sm:$0xff]
    %v180 = vld [vmem:[%s1 + $0x3f0] sm:$0xff]
    %v181 = vld [vmem:[%s1 + $0x3f8] sm:$0xff]
    %v182 = vld [vmem:[%s1 + $0x400] sm:$0xff]
    %v183 = vld [vmem:[%s1 + $0x408] sm:$0xff]
    %v184 = vld [vmem:[%s1 + $0x410] sm:$0xff]
    %v185 = vld [vmem:[%s1 + $0x418] sm:$0xff]
    %v186 = vld [vmem:[%s1 + $0x420] sm:$0xff]
    %v187 = vld [vmem:[%s1 + $0x428] sm:$0xff]
    %v188 = vld [vmem:[%s1 + $0x430] sm:$0xff]
    %v189 = vld [vmem:[%s1 + $0x438] sm:$0xff]
    %v190 = vld [vmem:[%s1 + $0x440] sm:$0xff]
    %v191 = vld [vmem:[%s1 + $0x448] sm:$0xff]
    %v192 = vld [vmem:[%s1 + $0x450] sm:$0xff]
    %v193 = vld [vmem:[%s1 + $0x458] sm:$0xff]
    %v194 = vld [vmem:[%s1 + $0x460] sm:$0xff]
    %v195 = vld [vmem:[%s1 + $0x468] sm:$0xff]
    %v196 = vld [vmem:[%s1 + $0x470] sm:$0xff]
    %v197 = vld [vmem:[%s1 + $0x478] sm:$0xff]
    %v198 = vld [vmem:[%s1 + $0x480] sm:$0xff]
    %v199 = vld [vmem:[%s1 + $0x488] sm:$0xff]
    %v200 = vld [vmem:[%s1 + $0x490] sm:$0xff]
    %v201 = vld [vmem:[%s1 + $0x498] sm:$0xff]
    %v202 = vld [vmem:[%s1 + $0x4a0] sm:$0xff]
    %v203 = vld [vmem:[%s1 + $0x4a8] sm:$0xff]
    %v204 = vld [vmem:[%s1 + $0x4b0] sm:$0xff]
    %v205 = vld [vmem:[%s1 + $0x4b8] sm:$0xff]
    %v206 = vld [vmem:[%s1 + $0x4c0] sm:$0xff]
    %v207 = vld [vmem:[%s1 + $0x4c8] sm:$0xff]
    %v208 = vld [vmem:[%s1 + $0x4d0] sm:$0xff]
    %v209 = vld [vmem:[%s1 + $0x4d8] sm:$0xff]
    %v210 = vld [vmem:[%s1 + $0x4e0] sm:$0xff]
    %v211 = vld [vmem:[%s1 + $0x4e8] sm:$0xff]
    %v212 = vld [vmem:[%s1 + $0x4f0] sm:$0xff]
    %v213 = vld [vmem:[%s1 + $0x4f8] sm:$0xff]
    %v214 = vld [vmem:[%s1 + $0x500] sm:$0xff]
    %v215 = vld [vmem:[%s1 + $0x508] sm:$0xff]
    %v216 = vld [vmem:[%s1 + $0x510] sm:$0xff]
    %v217 = vld [vmem:[%s1 + $0x518] sm:$0xff]
    %v218 = vld [vmem:[%s1 + $0x520] sm:$0xff]
    %v219 = vld [vmem:[%s1 + $0x528] sm:$0xff]
    %v220 = vld [vmem:[%s1 + $0x530] sm:$0xff]
    %v221 = vld [vmem:[%s1 + $0x538] sm:$0xff]
    %v222 = vld [vmem:[%s1 + $0x540] sm:$0xff]
    %v223 = vld [vmem:[%s1 + $0x548] sm:$0xff]
    %v224 = vld [vmem:[%s1 + $0x550] sm:$0xff]
    %v225 = vld [vmem:[%s1 + $0x558] sm:$0xff]
    %v226 = vld [vmem:[%s1 + $0x560] sm:$0xff]
    %v227 = vld [vmem:[%s1 + $0x568] sm:$0xff]
    %v228 = vld [vmem:[%s1 + $0x570] sm:$0xff]
    %v229 = vld [vmem:[%s1 + $0x578] sm:$0xff]
    %v230 = vld [vmem:[%s1 + $0x580] sm:$0xff]
    %v231 = vld [vmem:[%s1 + $0x588] sm:$0xff]
    %v232 = vld [vmem:[%s1 + $0x590] sm:$0xff]
    %v233 = vld [vmem:[%s1 + $0x598] sm:$0xff]
    %v234 = vld [vmem:[%s1 + $0x5a0] sm:$0xff]
    %v235 = vld [vmem:[%s1 + $0x5a8] sm:$0xff]
    %v236 = vld [vmem:[%s1 + $0x5b0] sm:$0xff]
    %v237 = vld [vmem:[%s1 + $0x5b8] sm:$0xff]
    %v238 = vld [vmem:[%s1 + $0x5c0] sm:$0xff]
    %v239 = vld [vmem:[%s1 + $0x5c8] sm:$0xff]
    %v240 = vld [vmem:[%s1 + $0x5d0] sm:$0xff]
    %v241 = vld [vmem:[%s1 + $0x5d8] sm:$0xff]
    %v242 = vld [vmem:[%s1 + $0x5e0] sm:$0xff]
    %v243 = vld [vmem:[%s1 + $0x5e8] sm:$0xff]
    %v244 = vld [vmem:[%s1 + $0x5f0] sm:$0xff]
    %v245 = vld [vmem:[%s1 + $0x5f8] sm:$0xff]
    %v246 = vld [vmem:[%s1 + $0x600] sm:$0xff]
    %v247 = vld [vmem:[%s1 + $0x608] sm:$0xff]
    %v248 = vld [vmem:[%s1 + $0x610] sm:$0xff]
    %v249 = vld [vmem:[%s1 + $0x618] sm:$0xff]
    %v250 = vld [vmem:[%s2] sm:$0xf]
    %v252 = vperm.slane %v250, 0
    %v253 = vperm.slane %v250, 1
    %v254 = vperm.slane %v250, 2
    %v255 = vperm.slane %v250, 3
    %v456 = vunpack.c.l.b16 %v54
    %v457 = vunpack.c.h.b16 %v54
    %v458 = vunpack.c.l.b16 %v55
    %v459 = vunpack.c.h.b16 %v55
    %v460 = vunpack.c.l.b16 %v56
    %v461 = vunpack.c.h.b16 %v56
    %v462 = vunpack.c.l.b16 %v57
    %v463 = vunpack.c.h.b16 %v57
    %v464 = vunpack.c.l.b16 %v58
    %v465 = vunpack.c.h.b16 %v58
    %v466 = vunpack.c.l.b16 %v59
    %v467 = vunpack.c.h.b16 %v59
    %v468 = vunpack.c.l.b16 %v60
    %v469 = vunpack.c.h.b16 %v60
    %v470 = vunpack.c.l.b16 %v61
    %v471 = vunpack.c.h.b16 %v61
    %v472 = vunpack.c.l.b16 %v62
    %v473 = vunpack.c.h.b16 %v62
    %v474 = vunpack.c.l.b16 %v63
    %v475 = vunpack.c.h.b16 %v63
    %v476 = vunpack.c.l.b16 %v64
    %v477 = vunpack.c.h.b16 %v64
    %v478 = vunpack.c.l.b16 %v65
    %v479 = vunpack.c.h.b16 %v65
    %v480 = vunpack.c.l.b16 %v66
    %v481 = vunpack.c.h.b16 %v66
    %v482 = vunpack.c.l.b16 %v67
    %v483 = vunpack.c.h.b16 %v67
    %v484 = vunpack.c.l.b16 %v68
    %v485 = vunpack.c.h.b16 %v68
    %v486 = vunpack.c.l.b16 %v69
    %v487 = vunpack.c.h.b16 %v69
    %v488 = vunpack.c.l.b16 %v70
    %v489 = vunpack.c.h.b16 %v70
    %v490 = vunpack.c.l.b16 %v71
    %v491 = vunpack.c.h.b16 %v71
    %v492 = vunpack.c.l.b16 %v72
    %v493 = vunpack.c.h.b16 %v72
    %v494 = vunpack.c.l.b16 %v73
    %v495 = vunpack.c.h.b16 %v73
    %v496 = vunpack.c.l.b16 %v74
    %v497 = vunpack.c.h.b16 %v74
    %v498 = vunpack.c.l.b16 %v75
    %v499 = vunpack.c.h.b16 %v75
    %v500 = vunpack.c.l.b16 %v76
    %v501 = vunpack.c.h.b16 %v76
    %v502 = vunpack.c.l.b16 %v77
    %v503 = vunpack.c.h.b16 %v77
    %v504 = vunpack.c.l.b16 %v78
    %v505 = vunpack.c.h.b16 %v78
    %v506 = vunpack.c.l.b16 %v79
    %v507 = vunpack.c.h.b16 %v79
    %v508 = vunpack.c.l.b16 %v80
    %v509 = vunpack.c.h.b16 %v80
    %v510 = vunpack.c.l.b16 %v81
    %v511 = vunpack.c.h.b16 %v81
    %v512 = vunpack.c.l.b16 %v82
    %v513 = vunpack.c.h.b16 %v82
    %v514 = vunpack.c.l.b16 %v83
    %v515 = vunpack.c.h.b16 %v83
    %v516 = vunpack.c.l.b16 %v84
    %v517 = vunpack.c.h.b16 %v84
    %v518 = vunpack.c.l.b16 %v85
    %v519 = vunpack.c.h.b16 %v85
    %v520 = vunpack.c.l.b16 %v86
    %v521 = vunpack.c.h.b16 %v86
    %v522 = vunpack.c.l.b16 %v87
    %v523 = vunpack.c.h.b16 %v87
    %v524 = vunpack.c.l.b16 %v88
    %v525 = vunpack.c.h.b16 %v88
    %v526 = vunpack.c.l.b16 %v89
    %v527 = vunpack.c.h.b16 %v89
    %v528 = vunpack.c.l.b16 %v90
    %v529 = vunpack.c.h.b16 %v90
    %v530 = vunpack.c.l.b16 %v91
    %v531 = vunpack.c.h.b16 %v91
    %v532 = vunpack.c.l.b16 %v92
    %v533 = vunpack.c.h.b16 %v92
    %v534 = vunpack.c.l.b16 %v93
    %v535 = vunpack.c.h.b16 %v93
    %v536 = vunpack.c.l.b16 %v94
    %v537 = vunpack.c.h.b16 %v94
    %v538 = vunpack.c.l.b16 %v95
    %v539 = vunpack.c.h.b16 %v95
    %v540 = vunpack.c.l.b16 %v96
    %v541 = vunpack.c.h.b16 %v96
    %v542 = vunpack.c.l.b16 %v97
    %v543 = vunpack.c.h.b16 %v97
    %v544 = vunpack.c.l.b16 %v98
    %v545 = vunpack.c.h.b16 %v98
    %v546 = vunpack.c.l.b16 %v99
    %v547 = vunpack.c.h.b16 %v99
    %v548 = vunpack.c.l.b16 %v100
    %v549 = vunpack.c.h.b16 %v100
    %v550 = vunpack.c.l.b16 %v101
    %v551 = vunpack.c.h.b16 %v101
    %v552 = vunpack.c.l.b16 %v102
    %v553 = vunpack.c.h.b16 %v102
    %v554 = vunpack.c.l.b16 %v103
    %v555 = vunpack.c.h.b16 %v103
    %v556 = vunpack.c.l.b16 %v104
    %v557 = vunpack.c.h.b16 %v104
    %v558 = vunpack.c.l.b16 %v105
    %v559 = vunpack.c.h.b16 %v105
    %v560 = vunpack.c.l.b16 %v106
    %v561 = vunpack.c.h.b16 %v106
    %v562 = vunpack.c.l.b16 %v107
    %v563 = vunpack.c.h.b16 %v107
    %v564 = vunpack.c.l.b16 %v108
    %v565 = vunpack.c.h.b16 %v108
    %v566 = vunpack.c.l.b16 %v109
    %v567 = vunpack.c.h.b16 %v109
    %v568 = vunpack.c.l.b16 %v110
    %v569 = vunpack.c.h.b16 %v110
    %v570 = vunpack.c.l.b16 %v111
    %v571 = vunpack.c.h.b16 %v111
    %v572 = vunpack.c.l.b16 %v112
    %v573 = vunpack.c.h.b16 %v112
    %v574 = vunpack.c.l.b16 %v113
    %v575 = vunpack.c.h.b16 %v113
    %v576 = vunpack.c.l.b16 %v114
    %v577 = vunpack.c.h.b16 %v114
    %v578 = vunpack.c.l.b16 %v115
    %v579 = vunpack.c.h.b16 %v115
    %v580 = vunpack.c.l.b16 %v116
    %v581 = vunpack.c.h.b16 %v116
    %v582 = vunpack.c.l.b16 %v117
    %v583 = vunpack.c.h.b16 %v117
    %v584 = vunpack.c.l.b16 %v118
    %v585 = vunpack.c.h.b16 %v118
    %v586 = vunpack.c.l.b16 %v119
    %v587 = vunpack.c.h.b16 %v119
    %v588 = vunpack.c.l.b16 %v120
    %v589 = vunpack.c.h.b16 %v120
    %v590 = vunpack.c.l.b16 %v121
    %v591 = vunpack.c.h.b16 %v121
    %v592 = vunpack.c.l.b16 %v122
    %v593 = vunpack.c.h.b16 %v122
    %v594 = vunpack.c.l.b16 %v123
    %v595 = vunpack.c.h.b16 %v123
    %v596 = vunpack.c.l.b16 %v124
    %v597 = vunpack.c.h.b16 %v124
    %v598 = vunpack.c.l.b16 %v125
    %v599 = vunpack.c.h.b16 %v125
    %v600 = vunpack.c.l.b16 %v126
    %v601 = vunpack.c.h.b16 %v126
    %v602 = vunpack.c.l.b16 %v127
    %v603 = vunpack.c.h.b16 %v127
    %v604 = vunpack.c.l.b16 %v128
    %v605 = vunpack.c.h.b16 %v128
    %v606 = vunpack.c.l.b16 %v129
    %v607 = vunpack.c.h.b16 %v129
    %v608 = vunpack.c.l.b16 %v130
    %v609 = vunpack.c.h.b16 %v130
    %v610 = vunpack.c.l.b16 %v131
    %v611 = vunpack.c.h.b16 %v131
    %v612 = vunpack.c.l.b16 %v132
    %v613 = vunpack.c.h.b16 %v132
    %v614 = vunpack.c.l.b16 %v133
    %v615 = vunpack.c.h.b16 %v133
    %v616 = vunpack.c.l.b16 %v134
    %v617 = vunpack.c.h.b16 %v134
    %v618 = vunpack.c.l.b16 %v135
    %v619 = vunpack.c.h.b16 %v135
    %v620 = vunpack.c.l.b16 %v136
    %v621 = vunpack.c.h.b16 %v136
    %v622 = vunpack.c.l.b16 %v137
    %v623 = vunpack.c.h.b16 %v137
    %v624 = vunpack.c.l.b16 %v138
    %v625 = vunpack.c.h.b16 %v138
    %v626 = vunpack.c.l.b16 %v139
    %v627 = vunpack.c.h.b16 %v139
    %v628 = vunpack.c.l.b16 %v140
    %v629 = vunpack.c.h.b16 %v140
    %v630 = vunpack.c.l.b16 %v141
    %v631 = vunpack.c.h.b16 %v141
    %v632 = vunpack.c.l.b16 %v142
    %v633 = vunpack.c.h.b16 %v142
    %v634 = vunpack.c.l.b16 %v143
    %v635 = vunpack.c.h.b16 %v143
    %v636 = vunpack.c.l.b16 %v144
    %v637 = vunpack.c.h.b16 %v144
    %v638 = vunpack.c.l.b16 %v145
    %v639 = vunpack.c.h.b16 %v145
    %v640 = vunpack.c.l.b16 %v146
    %v641 = vunpack.c.h.b16 %v146
    %v642 = vunpack.c.l.b16 %v147
    %v643 = vunpack.c.h.b16 %v147
    %v644 = vunpack.c.l.b16 %v148
    %v645 = vunpack.c.h.b16 %v148
    %v646 = vunpack.c.l.b16 %v149
    %v647 = vunpack.c.h.b16 %v149
    %v648 = vunpack.c.l.b16 %v150
    %v649 = vunpack.c.h.b16 %v150
    %v650 = vunpack.c.l.b16 %v151
    %v651 = vunpack.c.h.b16 %v151
    %v652 = vunpack.c.l.b16 %v152
    %v653 = vunpack.c.h.b16 %v152
    %v654 = vunpack.c.l.b16 %v153
    %v655 = vunpack.c.h.b16 %v153
    %v656 = vunpack.c.l.b16 %v154
    %v657 = vunpack.c.h.b16 %v154
    %v658 = vunpack.c.l.b16 %v155
    %v659 = vunpack.c.h.b16 %v155
    %v660 = vunpack.c.l.b16 %v156
    %v661 = vunpack.c.h.b16 %v156
    %v662 = vunpack.c.l.b16 %v157
    %v663 = vunpack.c.h.b16 %v157
    %v664 = vunpack.c.l.b16 %v158
    %v665 = vunpack.c.h.b16 %v158
    %v666 = vunpack.c.l.b16 %v159
    %v667 = vunpack.c.h.b16 %v159
    %v668 = vunpack.c.l.b16 %v160
    %v669 = vunpack.c.h.b16 %v160
    %v670 = vunpack.c.l.b16 %v161
    %v671 = vunpack.c.h.b16 %v161
    %v672 = vunpack.c.l.b16 %v162
    %v673 = vunpack.c.h.b16 %v162
    %v674 = vunpack.c.l.b16 %v163
    %v675 = vunpack.c.h.b16 %v163
    %v676 = vunpack.c.l.b16 %v164
    %v677 = vunpack.c.h.b16 %v164
    %v678 = vunpack.c.l.b16 %v165
    %v679 = vunpack.c.h.b16 %v165
    %v680 = vunpack.c.l.b16 %v166
    %v681 = vunpack.c.h.b16 %v166
    %v682 = vunpack.c.l.b16 %v167
    %v683 = vunpack.c.h.b16 %v167
    %v684 = vunpack.c.l.b16 %v168
    %v685 = vunpack.c.h.b16 %v168
    %v686 = vunpack.c.l.b16 %v169
    %v687 = vunpack.c.h.b16 %v169
    %v688 = vunpack.c.l.b16 %v170
    %v689 = vunpack.c.h.b16 %v170
    %v690 = vunpack.c.l.b16 %v171
    %v691 = vunpack.c.h.b16 %v171
    %v692 = vunpack.c.l.b16 %v172
    %v693 = vunpack.c.h.b16 %v172
    %v694 = vunpack.c.l.b16 %v173
    %v695 = vunpack.c.h.b16 %v173
    %v696 = vunpack.c.l.b16 %v174
    %v697 = vunpack.c.h.b16 %v174
    %v698 = vunpack.c.l.b16 %v175
    %v699 = vunpack.c.h.b16 %v175
    %v700 = vunpack.c.l.b16 %v176
    %v701 = vunpack.c.h.b16 %v176
    %v702 = vunpack.c.l.b16 %v177
    %v703 = vunpack.c.h.b16 %v177
    %v704 = vunpack.c.l.b16 %v178
    %v705 = vunpack.c.h.b16 %v178
    %v706 = vunpack.c.l.b16 %v179
    %v707 = vunpack.c.h.b16 %v179
    %v708 = vunpack.c.l.b16 %v180
    %v709 = vunpack.c.h.b16 %v180
    %v710 = vunpack.c.l.b16 %v181
    %v711 = vunpack.c.h.b16 %v181
    %v712 = vunpack.c.l.b16 %v182
    %v713 = vunpack.c.h.b16 %v182
    %v714 = vunpack.c.l.b16 %v183
    %v715 = vunpack.c.h.b16 %v183
    %v716 = vunpack.c.l.b16 %v184
    %v717 = vunpack.c.h.b16 %v184
    %v718 = vunpack.c.l.b16 %v185
    %v719 = vunpack.c.h.b16 %v185
    %v720 = vunpack.c.l.b16 %v186
    %v721 = vunpack.c.h.b16 %v186
    %v722 = vunpack.c.l.b16 %v187
    %v723 = vunpack.c.h.b16 %v187
    %v724 = vunpack.c.l.b16 %v188
    %v725 = vunpack.c.h.b16 %v188
    %v726 = vunpack.c.l.b16 %v189
    %v727 = vunpack.c.h.b16 %v189
    %v728 = vunpack.c.l.b16 %v190
    %v729 = vunpack.c.h.b16 %v190
    %v730 = vunpack.c.l.b16 %v191
    %v731 = vunpack.c.h.b16 %v191
    %v732 = vunpack.c.l.b16 %v192
    %v733 = vunpack.c.h.b16 %v192
    %v734 = vunpack.c.l.b16 %v193
    %v735 = vunpack.c.h.b16 %v193
    %v736 = vunpack.c.l.b16 %v194
    %v737 = vunpack.c.h.b16 %v194
    %v738 = vunpack.c.l.b16 %v195
    %v739 = vunpack.c.h.b16 %v195
    %v740 = vunpack.c.l.b16 %v196
    %v741 = vunpack.c.h.b16 %v196
    %v742 = vunpack.c.l.b16 %v197
    %v743 = vunpack.c.h.b16 %v197
    %v744 = vunpack.c.l.b16 %v198
    %v745 = vunpack.c.h.b16 %v198
    %v746 = vunpack.c.l.b16 %v199
    %v747 = vunpack.c.h.b16 %v199
    %v748 = vunpack.c.l.b16 %v200
    %v749 = vunpack.c.h.b16 %v200
    %v750 = vunpack.c.l.b16 %v201
    %v751 = vunpack.c.h.b16 %v201
    %v752 = vunpack.c.l.b16 %v202
    %v753 = vunpack.c.h.b16 %v202
    %v754 = vunpack.c.l.b16 %v203
    %v755 = vunpack.c.h.b16 %v203
    %v756 = vunpack.c.l.b16 %v204
    %v757 = vunpack.c.h.b16 %v204
    %v758 = vunpack.c.l.b16 %v205
    %v759 = vunpack.c.h.b16 %v205
    %v760 = vunpack.c.l.b16 %v206
    %v761 = vunpack.c.h.b16 %v206
    %v762 = vunpack.c.l.b16 %v207
    %v763 = vunpack.c.h.b16 %v207
    %v764 = vunpack.c.l.b16 %v208
    %v765 = vunpack.c.h.b16 %v208
    %v766 = vunpack.c.l.b16 %v209
    %v767 = vunpack.c.h.b16 %v209
    %v768 = vunpack.c.l.b16 %v210
    %v769 = vunpack.c.h.b16 %v210
    %v770 = vunpack.c.l.b16 %v211
    %v771 = vunpack.c.h.b16 %v211
    %v772 = vunpack.c.l.b16 %v212
    %v773 = vunpack.c.h.b16 %v212
    %v774 = vunpack.c.l.b16 %v213
    %v775 = vunpack.c.h.b16 %v213
    %v776 = vunpack.c.l.b16 %v214
    %v777 = vunpack.c.h.b16 %v214
    %v778 = vunpack.c.l.b16 %v215
    %v779 = vunpack.c.h.b16 %v215
    %v780 = vunpack.c.l.b16 %v216
    %v781 = vunpack.c.h.b16 %v216
    %v782 = vunpack.c.l.b16 %v217
    %v783 = vunpack.c.h.b16 %v217
    %v784 = vunpack.c.l.b16 %v218
    %v785 = vunpack.c.h.b16 %v218
    %v786 = vunpack.c.l.b16 %v219
    %v787 = vunpack.c.h.b16 %v219
    %v788 = vunpack.c.l.b16 %v220
    %v789 = vunpack.c.h.b16 %v220
    %v790 = vunpack.c.l.b16 %v221
    %v791 = vunpack.c.h.b16 %v221
    %v792 = vunpack.c.l.b16 %v222
    %v793 = vunpack.c.h.b16 %v222
    %v794 = vunpack.c.l.b16 %v223
    %v795 = vunpack.c.h.b16 %v223
    %v796 = vunpack.c.l.b16 %v224
    %v797 = vunpack.c.h.b16 %v224
    %v798 = vunpack.c.l.b16 %v225
    %v799 = vunpack.c.h.b16 %v225
    %v800 = vunpack.c.l.b16 %v226
    %v801 = vunpack.c.h.b16 %v226
    %v802 = vunpack.c.l.b16 %v227
    %v803 = vunpack.c.h.b16 %v227
    %v804 = vunpack.c.l.b16 %v228
    %v805 = vunpack.c.h.b16 %v228
    %v806 = vunpack.c.l.b16 %v229
    %v807 = vunpack.c.h.b16 %v229
    %v808 = vunpack.c.l.b16 %v230
    %v809 = vunpack.c.h.b16 %v230
    %v810 = vunpack.c.l.b16 %v231
    %v811 = vunpack.c.h.b16 %v231
    %v812 = vunpack.c.l.b16 %v232
    %v813 = vunpack.c.h.b16 %v232
    %v814 = vunpack.c.l.b16 %v233
    %v815 = vunpack.c.h.b16 %v233
    %v816 = vunpack.c.l.b16 %v234
    %v817 = vunpack.c.h.b16 %v234
    %v818 = vunpack.c.l.b16 %v235
    %v819 = vunpack.c.h.b16 %v235
    %v820 = vunpack.c.l.b16 %v236
    %v821 = vunpack.c.h.b16 %v236
    %v822 = vunpack.c.l.b16 %v237
    %v823 = vunpack.c.h.b16 %v237
    %v824 = vunpack.c.l.b16 %v238
    %v825 = vunpack.c.h.b16 %v238
    %v826 = vunpack.c.l.b16 %v239
    %v827 = vunpack.c.h.b16 %v239
    %v828 = vunpack.c.l.b16 %v240
    %v829 = vunpack.c.h.b16 %v240
    %v830 = vunpack.c.l.b16 %v241
    %v831 = vunpack.c.h.b16 %v241
    %v832 = vunpack.c.l.b16 %v242
    %v833 = vunpack.c.h.b16 %v242
    %v834 = vunpack.c.l.b16 %v243
    %v835 = vunpack.c.h.b16 %v243
    %v836 = vunpack.c.l.b16 %v244
    %v837 = vunpack.c.h.b16 %v244
    %v838 = vunpack.c.l.b16 %v245
    %v839 = vunpack.c.h.b16 %v245
    %v840 = vunpack.c.l.b16 %v246
    %v841 = vunpack.c.h.b16 %v246
    %v842 = vunpack.c.l.b16 %v247
    %v843 = vunpack.c.h.b16 %v247
    %v844 = vunpack.c.l.b16 %v248
    %v845 = vunpack.c.h.b16 %v248
    %v846 = vunpack.c.l.b16 %v249
    %v847 = vunpack.c.h.b16 %v249
    %v848 = vpack.c.b16 %v460, %v456
    %v849 = vpack.c.b16 %v461, %v457
    %v850 = vpack.c.b16 %v462, %v458
    %v851 = vpack.c.b16 %v463, %v459
    %v852 = vpack.c.b16 %v468, %v464
    %v853 = vpack.c.b16 %v469, %v465
    %v854 = vpack.c.b16 %v470, %v466
    %v855 = vpack.c.b16 %v471, %v467
    %v856 = vpack.c.b16 %v476, %v472
    %v857 = vpack.c.b16 %v477, %v473
    %v858 = vpack.c.b16 %v478, %v474
    %v859 = vpack.c.b16 %v479, %v475
    %v860 = vpack.c.b16 %v484, %v480
    %v861 = vpack.c.b16 %v485, %v481
    %v862 = vpack.c.b16 %v486, %v482
    %v863 = vpack.c.b16 %v487, %v483
    %v864 = vpack.c.b16 %v492, %v488
    %v865 = vpack.c.b16 %v493, %v489
    %v866 = vpack.c.b16 %v494, %v490
    %v867 = vpack.c.b16 %v495, %v491
    %v868 = vpack.c.b16 %v500, %v496
    %v869 = vpack.c.b16 %v501, %v497
    %v870 = vpack.c.b16 %v502, %v498
    %v871 = vpack.c.b16 %v503, %v499
    %v872 = vpack.c.b16 %v508, %v504
    %v873 = vpack.c.b16 %v509, %v505
    %v874 = vpack.c.b16 %v510, %v506
    %v875 = vpack.c.b16 %v511, %v507
    %v876 = vpack.c.b16 %v516, %v512
    %v877 = vpack.c.b16 %v517, %v513
    %v878 = vpack.c.b16 %v518, %v514
    %v879 = vpack.c.b16 %v519, %v515
    %v880 = vpack.c.b16 %v524, %v520
    %v881 = vpack.c.b16 %v525, %v521
    %v882 = vpack.c.b16 %v526, %v522
    %v883 = vpack.c.b16 %v527, %v523
    %v884 = vpack.c.b16 %v532, %v528
    %v885 = vpack.c.b16 %v533, %v529
    %v886 = vpack.c.b16 %v534, %v530
    %v887 = vpack.c.b16 %v535, %v531
    %v888 = vpack.c.b16 %v540, %v536
    %v889 = vpack.c.b16 %v541, %v537
    %v890 = vpack.c.b16 %v542, %v538
    %v891 = vpack.c.b16 %v543, %v539
    %v892 = vpack.c.b16 %v548, %v544
    %v893 = vpack.c.b16 %v549, %v545
    %v894 = vpack.c.b16 %v550, %v546
    %v895 = vpack.c.b16 %v551, %v547
    %v896 = vpack.c.b16 %v556, %v552
    %v897 = vpack.c.b16 %v557, %v553
    %v898 = vpack.c.b16 %v558, %v554
    %v899 = vpack.c.b16 %v559, %v555
    %v900 = vpack.c.b16 %v564, %v560
    %v901 = vpack.c.b16 %v565, %v561
    %v902 = vpack.c.b16 %v566, %v562
    %v903 = vpack.c.b16 %v567, %v563
    %v904 = vpack.c.b16 %v572, %v568
    %v905 = vpack.c.b16 %v573, %v569
    %v906 = vpack.c.b16 %v574, %v570
    %v907 = vpack.c.b16 %v575, %v571
    %v908 = vpack.c.b16 %v580, %v576
    %v909 = vpack.c.b16 %v581, %v577
    %v910 = vpack.c.b16 %v582, %v578
    %v911 = vpack.c.b16 %v583, %v579
    %v912 = vpack.c.b16 %v588, %v584
    %v913 = vpack.c.b16 %v589, %v585
    %v914 = vpack.c.b16 %v590, %v586
    %v915 = vpack.c.b16 %v591, %v587
    %v916 = vpack.c.b16 %v596, %v592
    %v917 = vpack.c.b16 %v597, %v593
    %v918 = vpack.c.b16 %v598, %v594
    %v919 = vpack.c.b16 %v599, %v595
    %v920 = vpack.c.b16 %v604, %v600
    %v921 = vpack.c.b16 %v605, %v601
    %v922 = vpack.c.b16 %v606, %v602
    %v923 = vpack.c.b16 %v607, %v603
    %v924 = vpack.c.b16 %v612, %v608
    %v925 = vpack.c.b16 %v613, %v609
    %v926 = vpack.c.b16 %v614, %v610
    %v927 = vpack.c.b16 %v615, %v611
    %v928 = vpack.c.b16 %v620, %v616
    %v929 = vpack.c.b16 %v621, %v617
    %v930 = vpack.c.b16 %v622, %v618
    %v931 = vpack.c.b16 %v623, %v619
    %v932 = vpack.c.b16 %v628, %v624
    %v933 = vpack.c.b16 %v629, %v625
    %v934 = vpack.c.b16 %v630, %v626
    %v935 = vpack.c.b16 %v631, %v627
    %v936 = vpack.c.b16 %v636, %v632
    %v937 = vpack.c.b16 %v637, %v633
    %v938 = vpack.c.b16 %v638, %v634
    %v939 = vpack.c.b16 %v639, %v635
    %v940 = vpack.c.b16 %v644, %v640
    %v941 = vpack.c.b16 %v645, %v641
    %v942 = vpack.c.b16 %v646, %v642
    %v943 = vpack.c.b16 %v647, %v643
    %v944 = vpack.c.b16 %v652, %v648
    %v945 = vpack.c.b16 %v653, %v649
    %v946 = vpack.c.b16 %v654, %v650
    %v947 = vpack.c.b16 %v655, %v651
    %v948 = vpack.c.b16 %v660, %v656
    %v949 = vpack.c.b16 %v661, %v657
    %v950 = vpack.c.b16 %v662, %v658
    %v951 = vpack.c.b16 %v663, %v659
    %v952 = vpack.c.b16 %v668, %v664
    %v953 = vpack.c.b16 %v669, %v665
    %v954 = vpack.c.b16 %v670, %v666
    %v955 = vpack.c.b16 %v671, %v667
    %v956 = vpack.c.b16 %v676, %v672
    %v957 = vpack.c.b16 %v677, %v673
    %v958 = vpack.c.b16 %v678, %v674
    %v959 = vpack.c.b16 %v679, %v675
    %v960 = vpack.c.b16 %v684, %v680
    %v961 = vpack.c.b16 %v685, %v681
    %v962 = vpack.c.b16 %v686, %v682
    %v963 = vpack.c.b16 %v687, %v683
    %v964 = vpack.c.b16 %v692, %v688
    %v965 = vpack.c.b16 %v693, %v689
    %v966 = vpack.c.b16 %v694, %v690
    %v967 = vpack.c.b16 %v695, %v691
    %v968 = vpack.c.b16 %v700, %v696
    %v969 = vpack.c.b16 %v701, %v697
    %v970 = vpack.c.b16 %v702, %v698
    %v971 = vpack.c.b16 %v703, %v699
    %v972 = vpack.c.b16 %v708, %v704
    %v973 = vpack.c.b16 %v709, %v705
    %v974 = vpack.c.b16 %v710, %v706
    %v975 = vpack.c.b16 %v711, %v707
    %v976 = vpack.c.b16 %v716, %v712
    %v977 = vpack.c.b16 %v717, %v713
    %v978 = vpack.c.b16 %v718, %v714
    %v979 = vpack.c.b16 %v719, %v715
    %v980 = vpack.c.b16 %v724, %v720
    %v981 = vpack.c.b16 %v725, %v721
    %v982 = vpack.c.b16 %v726, %v722
    %v983 = vpack.c.b16 %v727, %v723
    %v984 = vpack.c.b16 %v732, %v728
    %v985 = vpack.c.b16 %v733, %v729
    %v986 = vpack.c.b16 %v734, %v730
    %v987 = vpack.c.b16 %v735, %v731
    %v988 = vpack.c.b16 %v740, %v736
    %v989 = vpack.c.b16 %v741, %v737
    %v990 = vpack.c.b16 %v742, %v738
    %v991 = vpack.c.b16 %v743, %v739
    %v992 = vpack.c.b16 %v748, %v744
    %v993 = vpack.c.b16 %v749, %v745
    %v994 = vpack.c.b16 %v750, %v746
    %v995 = vpack.c.b16 %v751, %v747
    %v996 = vpack.c.b16 %v756, %v752
    %v997 = vpack.c.b16 %v757, %v753
    %v998 = vpack.c.b16 %v758, %v754
    %v999 = vpack.c.b16 %v759, %v755
    %v1000 = vpack.c.b16 %v764, %v760
    %v1001 = vpack.c.b16 %v765, %v761
    %v1002 = vpack.c.b16 %v766, %v762
    %v1003 = vpack.c.b16 %v767, %v763
    %v1004 = vpack.c.b16 %v772, %v768
    %v1005 = vpack.c.b16 %v773, %v769
    %v1006 = vpack.c.b16 %v774, %v770
    %v1007 = vpack.c.b16 %v775, %v771
    %v1008 = vpack.c.b16 %v780, %v776
    %v1009 = vpack.c.b16 %v781, %v777
    %v1010 = vpack.c.b16 %v782, %v778
    %v1011 = vpack.c.b16 %v783, %v779
    %v1012 = vpack.c.b16 %v788, %v784
    %v1013 = vpack.c.b16 %v789, %v785
    %v1014 = vpack.c.b16 %v790, %v786
    %v1015 = vpack.c.b16 %v791, %v787
    %v1016 = vpack.c.b16 %v796, %v792
    %v1017 = vpack.c.b16 %v797, %v793
    %v1018 = vpack.c.b16 %v798, %v794
    %v1019 = vpack.c.b16 %v799, %v795
    %v1020 = vpack.c.b16 %v804, %v800
    %v1021 = vpack.c.b16 %v805, %v801
    %v1022 = vpack.c.b16 %v806, %v802
    %v1023 = vpack.c.b16 %v807, %v803
    %v1024 = vpack.c.b16 %v812, %v808
    %v1025 = vpack.c.b16 %v813, %v809
    %v1026 = vpack.c.b16 %v814, %v810
    %v1027 = vpack.c.b16 %v815, %v811
    %v1028 = vpack.c.b16 %v820, %v816
    %v1029 = vpack.c.b16 %v821, %v817
    %v1030 = vpack.c.b16 %v822, %v818
    %v1031 = vpack.c.b16 %v823, %v819
    %v1032 = vpack.c.b16 %v828, %v824
    %v1033 = vpack.c.b16 %v829, %v825
    %v1034 = vpack.c.b16 %v830, %v826
    %v1035 = vpack.c.b16 %v831, %v827
    %v1036 = vpack.c.b16 %v836, %v832
    %v1037 = vpack.c.b16 %v837, %v833
    %v1038 = vpack.c.b16 %v838, %v834
    %v1039 = vpack.c.b16 %v839, %v835
    %v1040 = vpack.c.b16 %v844, %v840
    %v1041 = vpack.c.b16 %v845, %v841
    %v1042 = vpack.c.b16 %v846, %v842
    %v1043 = vpack.c.b16 %v847, %v843
    %vm1240 = vcmask 130048
    %v1242 = vsel %vm1240, %v53, 0
    %1244 = vmatpush.bf16.msra.mxu0 %v876
    %1245 = vmatpush.bf16.msra.mxu0 %v872
    %1246 = vmatpush.bf16.msra.mxu0 %v868
    %1247 = vmatpush.bf16.msra.mxu0 %v864
    %1248 = vmatpush.bf16.msra.mxu0 %v860
    %1249 = vmatpush.bf16.msra.mxu0 %v856
    %1250 = vmatpush.bf16.msra.mxu0 %v852
    %1251 = vmatpush.bf16.msra.mxu0 %v848
    %1252 = vmatmul.bf16.gmra.mxu0 %v47
    %v1253 = vpop.f32.mrf.mxu0
    %v1254 = vadd.f32 %v252, %v1253
    %v1255 = vpop.f32.mrf.mxu0
    %1256 = vdwg.mxu0
    %1257 = vmatpush.bf16.msra.mxu0 %v908
    %1258 = vmatpush.bf16.msra.mxu0 %v904
    %1259 = vmatpush.bf16.msra.mxu0 %v900
    %1260 = vmatpush.bf16.msra.mxu0 %v896
    %1261 = vmatpush.bf16.msra.mxu0 %v892
    %1262 = vmatpush.bf16.msra.mxu0 %v888
    %1263 = vmatpush.bf16.msra.mxu0 %v884
    %1264 = vmatpush.bf16.msra.mxu0 %v880
    %1265 = vmatmul.bf16.gmra.mxu0 %v48
    %v1266 = vpop.f32.mrf.mxu0
    %v1267 = vadd.f32 %v1254, %v1266
    %v1268 = vpop.f32.mrf.mxu0
    %1269 = vdwg.mxu0
    %1270 = vmatpush.bf16.msra.mxu0 %v940
    %1271 = vmatpush.bf16.msra.mxu0 %v936
    %1272 = vmatpush.bf16.msra.mxu0 %v932
    %1273 = vmatpush.bf16.msra.mxu0 %v928
    %1274 = vmatpush.bf16.msra.mxu0 %v924
    %1275 = vmatpush.bf16.msra.mxu0 %v920
    %1276 = vmatpush.bf16.msra.mxu0 %v916
    %1277 = vmatpush.bf16.msra.mxu0 %v912
    %1278 = vmatmul.bf16.gmra.mxu0 %v49
    %v1279 = vpop.f32.mrf.mxu0
    %v1280 = vadd.f32 %v1267, %v1279
    %v1281 = vpop.f32.mrf.mxu0
    %1282 = vdwg.mxu0
    %1283 = vmatpush.bf16.msra.mxu0 %v972
    %1284 = vmatpush.bf16.msra.mxu0 %v968
    %1285 = vmatpush.bf16.msra.mxu0 %v964
    %1286 = vmatpush.bf16.msra.mxu0 %v960
    %1287 = vmatpush.bf16.msra.mxu0 %v956
    %1288 = vmatpush.bf16.msra.mxu0 %v952
    %1289 = vmatpush.bf16.msra.mxu0 %v948
    %1290 = vmatpush.bf16.msra.mxu0 %v944
    %1291 = vmatmul.bf16.gmra.mxu0 %v50
    %v1292 = vpop.f32.mrf.mxu0
    %v1293 = vadd.f32 %v1280, %v1292
    %v1294 = vpop.f32.mrf.mxu0
    %1295 = vdwg.mxu0
    %1296 = vmatpush.bf16.msra.mxu0 %v1004
    %1297 = vmatpush.bf16.msra.mxu0 %v1000
    %1298 = vmatpush.bf16.msra.mxu0 %v996
    %1299 = vmatpush.bf16.msra.mxu0 %v992
    %1300 = vmatpush.bf16.msra.mxu0 %v988
    %1301 = vmatpush.bf16.msra.mxu0 %v984
    %1302 = vmatpush.bf16.msra.mxu0 %v980
    %1303 = vmatpush.bf16.msra.mxu0 %v976
    %1304 = vmatmul.bf16.gmra.mxu0 %v51
    %v1305 = vpop.f32.mrf.mxu0
    %v1306 = vadd.f32 %v1293, %v1305
    %v1307 = vpop.f32.mrf.mxu0
    %1308 = vdwg.mxu0
    %1309 = vmatpush.bf16.msra.mxu0 %v1036
    %1310 = vmatpush.bf16.msra.mxu0 %v1032
    %1311 = vmatpush.bf16.msra.mxu0 %v1028
    %1312 = vmatpush.bf16.msra.mxu0 %v1024
    %1313 = vmatpush.bf16.msra.mxu0 %v1020
    %1314 = vmatpush.bf16.msra.mxu0 %v1016
    %1315 = vmatpush.bf16.msra.mxu0 %v1012
    %1316 = vmatpush.bf16.msra.mxu0 %v1008
    %1317 = vmatmul.bf16.gmra.mxu0 %v52
    %v1318 = vpop.f32.mrf.mxu0
    %v1319 = vadd.f32 %v1306, %v1318
    %v1320 = vpop.f32.mrf.mxu0
    %1321 = vdwg.mxu0
    %1322 = vmatpush.bf16.msra.mxu0 0
    %1323 = vmatpush.bf16.msra.mxu0 0
    %1324 = vmatpush.bf16.msra.mxu0 0
    %1325 = vmatpush.bf16.msra.mxu0 0
    %1326 = vmatpush.bf16.msra.mxu0 0
    %1327 = vmatpush.bf16.msra.mxu0 0
    %1328 = vmatpush.bf16.msra.mxu0 0
    %1329 = vmatpush.bf16.msra.mxu0 %v1040
    %1330 = vmatmul.bf16.gmra.mxu0 %v1242
    %v1331 = vpop.f32.mrf.mxu0
    %v1332 = vadd.f32 %v1319, %v1331
    %v1333 = vpop.f32.mrf.mxu0
    %1334 = vdwg.mxu0
    %1335 = vmatpush.bf16.msra.mxu0 %v877
    %1336 = vmatpush.bf16.msra.mxu0 %v873
    %1337 = vmatpush.bf16.msra.mxu0 %v869
    %1338 = vmatpush.bf16.msra.mxu0 %v865
    %1339 = vmatpush.bf16.msra.mxu0 %v861
    %1340 = vmatpush.bf16.msra.mxu0 %v857
    %1341 = vmatpush.bf16.msra.mxu0 %v853
    %1342 = vmatpush.bf16.msra.mxu0 %v849
    %1343 = vmatmul.bf16.gmra.mxu0 %v47
    %v1344 = vpop.f32.mrf.mxu0
    %v1345 = vadd.f32 %v253, %v1344
    %v1346 = vpop.f32.mrf.mxu0
    %1347 = vdwg.mxu0
    %1348 = vmatpush.bf16.msra.mxu0 %v909
    %1349 = vmatpush.bf16.msra.mxu0 %v905
    %1350 = vmatpush.bf16.msra.mxu0 %v901
    %1351 = vmatpush.bf16.msra.mxu0 %v897
    %1352 = vmatpush.bf16.msra.mxu0 %v893
    %1353 = vmatpush.bf16.msra.mxu0 %v889
    %1354 = vmatpush.bf16.msra.mxu0 %v885
    %1355 = vmatpush.bf16.msra.mxu0 %v881
    %1356 = vmatmul.bf16.gmra.mxu0 %v48
    %v1357 = vpop.f32.mrf.mxu0
    %v1358 = vadd.f32 %v1345, %v1357
    %v1359 = vpop.f32.mrf.mxu0
    %1360 = vdwg.mxu0
    %1361 = vmatpush.bf16.msra.mxu0 %v941
    %1362 = vmatpush.bf16.msra.mxu0 %v937
    %1363 = vmatpush.bf16.msra.mxu0 %v933
    %1364 = vmatpush.bf16.msra.mxu0 %v929
    %1365 = vmatpush.bf16.msra.mxu0 %v925
    %1366 = vmatpush.bf16.msra.mxu0 %v921
    %1367 = vmatpush.bf16.msra.mxu0 %v917
    %1368 = vmatpush.bf16.msra.mxu0 %v913
    %1369 = vmatmul.bf16.gmra.mxu0 %v49
    %v1370 = vpop.f32.mrf.mxu0
    %v1371 = vadd.f32 %v1358, %v1370
    %v1372 = vpop.f32.mrf.mxu0
    %1373 = vdwg.mxu0
    %1374 = vmatpush.bf16.msra.mxu0 %v973
    %1375 = vmatpush.bf16.msra.mxu0 %v969
    %1376 = vmatpush.bf16.msra.mxu0 %v965
    %1377 = vmatpush.bf16.msra.mxu0 %v961
    %1378 = vmatpush.bf16.msra.mxu0 %v957
    %1379 = vmatpush.bf16.msra.mxu0 %v953
    %1380 = vmatpush.bf16.msra.mxu0 %v949
    %1381 = vmatpush.bf16.msra.mxu0 %v945
    %1382 = vmatmul.bf16.gmra.mxu0 %v50
    %v1383 = vpop.f32.mrf.mxu0
    %v1384 = vadd.f32 %v1371, %v1383
    %v1385 = vpop.f32.mrf.mxu0
    %1386 = vdwg.mxu0
    %1387 = vmatpush.bf16.msra.mxu0 %v1005
    %1388 = vmatpush.bf16.msra.mxu0 %v1001
    %1389 = vmatpush.bf16.msra.mxu0 %v997
    %1390 = vmatpush.bf16.msra.mxu0 %v993
    %1391 = vmatpush.bf16.msra.mxu0 %v989
    %1392 = vmatpush.bf16.msra.mxu0 %v985
    %1393 = vmatpush.bf16.msra.mxu0 %v981
    %1394 = vmatpush.bf16.msra.mxu0 %v977
    %1395 = vmatmul.bf16.gmra.mxu0 %v51
    %v1396 = vpop.f32.mrf.mxu0
    %v1397 = vadd.f32 %v1384, %v1396
    %v1398 = vpop.f32.mrf.mxu0
    %1399 = vdwg.mxu0
    %1400 = vmatpush.bf16.msra.mxu0 %v1037
    %1401 = vmatpush.bf16.msra.mxu0 %v1033
    %1402 = vmatpush.bf16.msra.mxu0 %v1029
    %1403 = vmatpush.bf16.msra.mxu0 %v1025
    %1404 = vmatpush.bf16.msra.mxu0 %v1021
    %1405 = vmatpush.bf16.msra.mxu0 %v1017
    %1406 = vmatpush.bf16.msra.mxu0 %v1013
    %1407 = vmatpush.bf16.msra.mxu0 %v1009
    %1408 = vmatmul.bf16.gmra.mxu0 %v52
    %v1409 = vpop.f32.mrf.mxu0
    %v1410 = vadd.f32 %v1397, %v1409
    %v1411 = vpop.f32.mrf.mxu0
    %1412 = vdwg.mxu0
    %1413 = vmatpush.bf16.msra.mxu0 0
    %1414 = vmatpush.bf16.msra.mxu0 0
    %1415 = vmatpush.bf16.msra.mxu0 0
    %1416 = vmatpush.bf16.msra.mxu0 0
    %1417 = vmatpush.bf16.msra.mxu0 0
    %1418 = vmatpush.bf16.msra.mxu0 0
    %1419 = vmatpush.bf16.msra.mxu0 0
    %1420 = vmatpush.bf16.msra.mxu0 %v1041
    %1421 = vmatmul.bf16.gmra.mxu0 %v1242
    %v1422 = vpop.f32.mrf.mxu0
    %v1423 = vadd.f32 %v1410, %v1422
    %v1424 = vpop.f32.mrf.mxu0
    %1425 = vdwg.mxu0
    %1426 = vmatpush.bf16.msra.mxu0 %v878
    %1427 = vmatpush.bf16.msra.mxu0 %v874
    %1428 = vmatpush.bf16.msra.mxu0 %v870
    %1429 = vmatpush.bf16.msra.mxu0 %v866
    %1430 = vmatpush.bf16.msra.mxu0 %v862
    %1431 = vmatpush.bf16.msra.mxu0 %v858
    %1432 = vmatpush.bf16.msra.mxu0 %v854
    %1433 = vmatpush.bf16.msra.mxu0 %v850
    %1434 = vmatmul.bf16.gmra.mxu0 %v47
    %v1435 = vpop.f32.mrf.mxu0
    %v1436 = vadd.f32 %v254, %v1435
    %v1437 = vpop.f32.mrf.mxu0
    %1438 = vdwg.mxu0
    %1439 = vmatpush.bf16.msra.mxu0 %v910
    %1440 = vmatpush.bf16.msra.mxu0 %v906
    %1441 = vmatpush.bf16.msra.mxu0 %v902
    %1442 = vmatpush.bf16.msra.mxu0 %v898
    %1443 = vmatpush.bf16.msra.mxu0 %v894
    %1444 = vmatpush.bf16.msra.mxu0 %v890
    %1445 = vmatpush.bf16.msra.mxu0 %v886
    %1446 = vmatpush.bf16.msra.mxu0 %v882
    %1447 = vmatmul.bf16.gmra.mxu0 %v48
    %v1448 = vpop.f32.mrf.mxu0
    %v1449 = vadd.f32 %v1436, %v1448
    %v1450 = vpop.f32.mrf.mxu0
    %1451 = vdwg.mxu0
    %1452 = vmatpush.bf16.msra.mxu0 %v942
    %1453 = vmatpush.bf16.msra.mxu0 %v938
    %1454 = vmatpush.bf16.msra.mxu0 %v934
    %1455 = vmatpush.bf16.msra.mxu0 %v930
    %1456 = vmatpush.bf16.msra.mxu0 %v926
    %1457 = vmatpush.bf16.msra.mxu0 %v922
    %1458 = vmatpush.bf16.msra.mxu0 %v918
    %1459 = vmatpush.bf16.msra.mxu0 %v914
    %1460 = vmatmul.bf16.gmra.mxu0 %v49
    %v1461 = vpop.f32.mrf.mxu0
    %v1462 = vadd.f32 %v1449, %v1461
    %v1463 = vpop.f32.mrf.mxu0
    %1464 = vdwg.mxu0
    %1465 = vmatpush.bf16.msra.mxu0 %v974
    %1466 = vmatpush.bf16.msra.mxu0 %v970
    %1467 = vmatpush.bf16.msra.mxu0 %v966
    %1468 = vmatpush.bf16.msra.mxu0 %v962
    %1469 = vmatpush.bf16.msra.mxu0 %v958
    %1470 = vmatpush.bf16.msra.mxu0 %v954
    %1471 = vmatpush.bf16.msra.mxu0 %v950
    %1472 = vmatpush.bf16.msra.mxu0 %v946
    %1473 = vmatmul.bf16.gmra.mxu0 %v50
    %v1474 = vpop.f32.mrf.mxu0
    %v1475 = vadd.f32 %v1462, %v1474
    %v1476 = vpop.f32.mrf.mxu0
    %1477 = vdwg.mxu0
    %1478 = vmatpush.bf16.msra.mxu0 %v1006
    %1479 = vmatpush.bf16.msra.mxu0 %v1002
    %1480 = vmatpush.bf16.msra.mxu0 %v998
    %1481 = vmatpush.bf16.msra.mxu0 %v994
    %1482 = vmatpush.bf16.msra.mxu0 %v990
    %1483 = vmatpush.bf16.msra.mxu0 %v986
    %1484 = vmatpush.bf16.msra.mxu0 %v982
    %1485 = vmatpush.bf16.msra.mxu0 %v978
    %1486 = vmatmul.bf16.gmra.mxu0 %v51
    %v1487 = vpop.f32.mrf.mxu0
    %v1488 = vadd.f32 %v1475, %v1487
    %v1489 = vpop.f32.mrf.mxu0
    %1490 = vdwg.mxu0
    %1491 = vmatpush.bf16.msra.mxu0 %v1038
    %1492 = vmatpush.bf16.msra.mxu0 %v1034
    %1493 = vmatpush.bf16.msra.mxu0 %v1030
    %1494 = vmatpush.bf16.msra.mxu0 %v1026
    %1495 = vmatpush.bf16.msra.mxu0 %v1022
    %1496 = vmatpush.bf16.msra.mxu0 %v1018
    %1497 = vmatpush.bf16.msra.mxu0 %v1014
    %1498 = vmatpush.bf16.msra.mxu0 %v1010
    %1499 = vmatmul.bf16.gmra.mxu0 %v52
    %v1500 = vpop.f32.mrf.mxu0
    %v1501 = vadd.f32 %v1488, %v1500
    %v1502 = vpop.f32.mrf.mxu0
    %1503 = vdwg.mxu0
    %1504 = vmatpush.bf16.msra.mxu0 0
    %1505 = vmatpush.bf16.msra.mxu0 0
    %1506 = vmatpush.bf16.msra.mxu0 0
    %1507 = vmatpush.bf16.msra.mxu0 0
    %1508 = vmatpush.bf16.msra.mxu0 0
    %1509 = vmatpush.bf16.msra.mxu0 0
    %1510 = vmatpush.bf16.msra.mxu0 0
    %1511 = vmatpush.bf16.msra.mxu0 %v1042
    %1512 = vmatmul.bf16.gmra.mxu0 %v1242
    %v1513 = vpop.f32.mrf.mxu0
    %v1514 = vadd.f32 %v1501, %v1513
    %v1515 = vpop.f32.mrf.mxu0
    %1516 = vdwg.mxu0
    %1517 = vmatpush.bf16.msra.mxu0 %v879
    %1518 = vmatpush.bf16.msra.mxu0 %v875
    %1519 = vmatpush.bf16.msra.mxu0 %v871
    %1520 = vmatpush.bf16.msra.mxu0 %v867
    %1521 = vmatpush.bf16.msra.mxu0 %v863
    %1522 = vmatpush.bf16.msra.mxu0 %v859
    %1523 = vmatpush.bf16.msra.mxu0 %v855
    %1524 = vmatpush.bf16.msra.mxu0 %v851
    %1525 = vmatmul.bf16.gmra.mxu0 %v47
    %v1526 = vpop.f32.mrf.mxu0
    %v1527 = vadd.f32 %v255, %v1526
    %v1528 = vpop.f32.mrf.mxu0
    %1529 = vdwg.mxu0
    %1530 = vmatpush.bf16.msra.mxu0 %v911
    %1531 = vmatpush.bf16.msra.mxu0 %v907
    %1532 = vmatpush.bf16.msra.mxu0 %v903
    %1533 = vmatpush.bf16.msra.mxu0 %v899
    %1534 = vmatpush.bf16.msra.mxu0 %v895
    %1535 = vmatpush.bf16.msra.mxu0 %v891
    %1536 = vmatpush.bf16.msra.mxu0 %v887
    %1537 = vmatpush.bf16.msra.mxu0 %v883
    %1538 = vmatmul.bf16.gmra.mxu0 %v48
    %v1539 = vpop.f32.mrf.mxu0
    %v1540 = vadd.f32 %v1527, %v1539
    %v1541 = vpop.f32.mrf.mxu0
    %1542 = vdwg.mxu0
    %1543 = vmatpush.bf16.msra.mxu0 %v943
    %1544 = vmatpush.bf16.msra.mxu0 %v939
    %1545 = vmatpush.bf16.msra.mxu0 %v935
    %1546 = vmatpush.bf16.msra.mxu0 %v931
    %1547 = vmatpush.bf16.msra.mxu0 %v927
    %1548 = vmatpush.bf16.msra.mxu0 %v923
    %1549 = vmatpush.bf16.msra.mxu0 %v919
    %1550 = vmatpush.bf16.msra.mxu0 %v915
    %1551 = vmatmul.bf16.gmra.mxu0 %v49
    %v1552 = vpop.f32.mrf.mxu0
    %v1553 = vadd.f32 %v1540, %v1552
    %v1554 = vpop.f32.mrf.mxu0
    %1555 = vdwg.mxu0
    %1556 = vmatpush.bf16.msra.mxu0 %v975
    %1557 = vmatpush.bf16.msra.mxu0 %v971
    %1558 = vmatpush.bf16.msra.mxu0 %v967
    %1559 = vmatpush.bf16.msra.mxu0 %v963
    %1560 = vmatpush.bf16.msra.mxu0 %v959
    %1561 = vmatpush.bf16.msra.mxu0 %v955
    %1562 = vmatpush.bf16.msra.mxu0 %v951
    %1563 = vmatpush.bf16.msra.mxu0 %v947
    %1564 = vmatmul.bf16.gmra.mxu0 %v50
    %v1565 = vpop.f32.mrf.mxu0
    %v1566 = vadd.f32 %v1553, %v1565
    %v1567 = vpop.f32.mrf.mxu0
    %1568 = vdwg.mxu0
    %1569 = vmatpush.bf16.msra.mxu0 %v1007
    %1570 = vmatpush.bf16.msra.mxu0 %v1003
    %1571 = vmatpush.bf16.msra.mxu0 %v999
    %1572 = vmatpush.bf16.msra.mxu0 %v995
    %1573 = vmatpush.bf16.msra.mxu0 %v991
    %1574 = vmatpush.bf16.msra.mxu0 %v987
    %1575 = vmatpush.bf16.msra.mxu0 %v983
    %1576 = vmatpush.bf16.msra.mxu0 %v979
    %1577 = vmatmul.bf16.gmra.mxu0 %v51
    %v1578 = vpop.f32.mrf.mxu0
    %v1579 = vadd.f32 %v1566, %v1578
    %v1580 = vpop.f32.mrf.mxu0
    %1581 = vdwg.mxu0
    %1582 = vmatpush.bf16.msra.mxu0 %v1039
    %1583 = vmatpush.bf16.msra.mxu0 %v1035
    %1584 = vmatpush.bf16.msra.mxu0 %v1031
    %1585 = vmatpush.bf16.msra.mxu0 %v1027
    %1586 = vmatpush.bf16.msra.mxu0 %v1023
    %1587 = vmatpush.bf16.msra.mxu0 %v1019
    %1588 = vmatpush.bf16.msra.mxu0 %v1015
    %1589 = vmatpush.bf16.msra.mxu0 %v1011
    %1590 = vmatmul.bf16.gmra.mxu0 %v52
    %v1591 = vpop.f32.mrf.mxu0
    %v1592 = vadd.f32 %v1579, %v1591
    %v1593 = vpop.f32.mrf.mxu0
    %1594 = vdwg.mxu0
    %1595 = vmatpush.bf16.msra.mxu0 0
    %1596 = vmatpush.bf16.msra.mxu0 0
    %1597 = vmatpush.bf16.msra.mxu0 0
    %1598 = vmatpush.bf16.msra.mxu0 0
    %1599 = vmatpush.bf16.msra.mxu0 0
    %1600 = vmatpush.bf16.msra.mxu0 0
    %1601 = vmatpush.bf16.msra.mxu0 0
    %1602 = vmatpush.bf16.msra.mxu0 %v1043
    %1603 = vmatmul.bf16.gmra.mxu0 %v1242
    %v1604 = vpop.f32.mrf.mxu0
    %v1605 = vadd.f32 %v1592, %v1604
    %v1606 = vpop.f32.mrf.mxu0
    %1607 = vdwg.mxu0
    %v1608 = vmax.f32 %v1332, 0.0
    %v1609 = vmax.f32 %v1423, 0.0
    %v1610 = vmax.f32 %v1514, 0.0
    %v1611 = vmax.f32 %v1605, 0.0
    %v1612 = vpack.c.bf16 %v1608, %v1608
    %v1613 = vpack.c.bf16 %v1609, %v1609
    %v1614 = vpack.c.bf16 %v1610, %v1610
    %v1615 = vpack.c.bf16 %v1611, %v1611
    %v1616 = vld [vmem:[%s3] sm:$0xff]
    %v1617 = vld [vmem:[%s3 + $0x8] sm:$0xff]
    %v1618 = vld [vmem:[%s3 + $0x10] sm:$0xff]
    %v1619 = vld [vmem:[%s3 + $0x18] sm:$0xff]
    %v1620 = vld [vmem:[%s3 + $0x20] sm:$0xff]
    %v1621 = vld [vmem:[%s3 + $0x28] sm:$0xff]
    %v1622 = vld [vmem:[%s3 + $0x30] sm:$0xff]
    %v1623 = vld [vmem:[%s3 + $0x38] sm:$0xff]
    %v1624 = vld [vmem:[%s3 + $0x40] sm:$0xff]
    %v1625 = vld [vmem:[%s3 + $0x48] sm:$0xff]
    %v1626 = vld [vmem:[%s3 + $0x50] sm:$0xff]
    %v1627 = vld [vmem:[%s3 + $0x58] sm:$0xff]
    %v1628 = vld [vmem:[%s3 + $0x60] sm:$0xff]
    %v1629 = vld [vmem:[%s3 + $0x68] sm:$0xff]
    %v1630 = vld [vmem:[%s3 + $0x70] sm:$0xff]
    %v1631 = vld [vmem:[%s3 + $0x78] sm:$0xff]
    %v1632 = vld [vmem:[%s3 + $0x80] sm:$0xff]
    %v1633 = vld [vmem:[%s3 + $0x88] sm:$0xff]
    %v1634 = vld [vmem:[%s3 + $0x90] sm:$0xff]
    %v1635 = vld [vmem:[%s3 + $0x98] sm:$0xff]
    %v1636 = vld [vmem:[%s3 + $0xa0] sm:$0xff]
    %v1637 = vld [vmem:[%s3 + $0xa8] sm:$0xff]
    %v1638 = vld [vmem:[%s3 + $0xb0] sm:$0xff]
    %v1639 = vld [vmem:[%s3 + $0xb8] sm:$0xff]
    %v1640 = vld [vmem:[%s3 + $0xc0] sm:$0xff]
    %v1641 = vld [vmem:[%s3 + $0xc8] sm:$0xff]
    %v1642 = vld [vmem:[%s3 + $0xd0] sm:$0xff]
    %v1643 = vld [vmem:[%s3 + $0xd8] sm:$0xff]
    %v1644 = vld [vmem:[%s3 + $0xe0] sm:$0xff]
    %v1645 = vld [vmem:[%s3 + $0xe8] sm:$0xff]
    %v1646 = vld [vmem:[%s3 + $0xf0] sm:$0xff]
    %v1647 = vld [vmem:[%s3 + $0xf8] sm:$0xff]
    %v1648 = vld [vmem:[%s3 + $0x100] sm:$0xff]
    %v1649 = vld [vmem:[%s3 + $0x108] sm:$0xff]
    %v1650 = vld [vmem:[%s3 + $0x110] sm:$0xff]
    %v1651 = vld [vmem:[%s3 + $0x118] sm:$0xff]
    %v1652 = vld [vmem:[%s3 + $0x120] sm:$0xff]
    %v1653 = vld [vmem:[%s3 + $0x128] sm:$0xff]
    %v1654 = vld [vmem:[%s3 + $0x130] sm:$0xff]
    %v1655 = vld [vmem:[%s3 + $0x138] sm:$0xff]
    %v1656 = vld [vmem:[%s3 + $0x140] sm:$0xff]
    %v1657 = vld [vmem:[%s3 + $0x148] sm:$0xff]
    %v1658 = vld [vmem:[%s3 + $0x150] sm:$0xff]
    %v1659 = vld [vmem:[%s3 + $0x158] sm:$0xff]
    %v1660 = vld [vmem:[%s3 + $0x160] sm:$0xff]
    %v1661 = vld [vmem:[%s3 + $0x168] sm:$0xff]
    %v1662 = vld [vmem:[%s3 + $0x170] sm:$0xff]
    %v1663 = vld [vmem:[%s3 + $0x178] sm:$0xff]
    %v1664 = vld [vmem:[%s3 + $0x180] sm:$0xff]
    %v1665 = vld [vmem:[%s3 + $0x188] sm:$0xff]
    %v1666 = vld [vmem:[%s3 + $0x190] sm:$0xff]
    %v1667 = vld [vmem:[%s3 + $0x198] sm:$0xff]
    %v1668 = vld [vmem:[%s3 + $0x1a0] sm:$0xff]
    %v1669 = vld [vmem:[%s3 + $0x1a8] sm:$0xff]
    %v1670 = vld [vmem:[%s3 + $0x1b0] sm:$0xff]
    %v1671 = vld [vmem:[%s3 + $0x1b8] sm:$0xff]
    %v1672 = vld [vmem:[%s3 + $0x1c0] sm:$0xff]
    %v1673 = vld [vmem:[%s3 + $0x1c8] sm:$0xff]
    %v1674 = vld [vmem:[%s3 + $0x1d0] sm:$0xff]
    %v1675 = vld [vmem:[%s3 + $0x1d8] sm:$0xff]
    %v1676 = vld [vmem:[%s3 + $0x1e0] sm:$0xff]
    %v1677 = vld [vmem:[%s3 + $0x1e8] sm:$0xff]
    %v1678 = vld [vmem:[%s3 + $0x1f0] sm:$0xff]
    %v1679 = vld [vmem:[%s3 + $0x1f8] sm:$0xff]
    %v1680 = vld [vmem:[%s4] sm:$0x3]
    %v1682 = vperm.slane %v1680, 0
    %v1683 = vperm.slane %v1680, 1
    %v1750 = vunpack.c.l.b16 %v1616
    %v1751 = vunpack.c.h.b16 %v1616
    %v1752 = vunpack.c.l.b16 %v1617
    %v1753 = vunpack.c.h.b16 %v1617
    %v1754 = vunpack.c.l.b16 %v1618
    %v1755 = vunpack.c.h.b16 %v1618
    %v1756 = vunpack.c.l.b16 %v1619
    %v1757 = vunpack.c.h.b16 %v1619
    %v1758 = vunpack.c.l.b16 %v1620
    %v1759 = vunpack.c.h.b16 %v1620
    %v1760 = vunpack.c.l.b16 %v1621
    %v1761 = vunpack.c.h.b16 %v1621
    %v1762 = vunpack.c.l.b16 %v1622
    %v1763 = vunpack.c.h.b16 %v1622
    %v1764 = vunpack.c.l.b16 %v1623
    %v1765 = vunpack.c.h.b16 %v1623
    %v1766 = vunpack.c.l.b16 %v1624
    %v1767 = vunpack.c.h.b16 %v1624
    %v1768 = vunpack.c.l.b16 %v1625
    %v1769 = vunpack.c.h.b16 %v1625
    %v1770 = vunpack.c.l.b16 %v1626
    %v1771 = vunpack.c.h.b16 %v1626
    %v1772 = vunpack.c.l.b16 %v1627
    %v1773 = vunpack.c.h.b16 %v1627
    %v1774 = vunpack.c.l.b16 %v1628
    %v1775 = vunpack.c.h.b16 %v1628
    %v1776 = vunpack.c.l.b16 %v1629
    %v1777 = vunpack.c.h.b16 %v1629
    %v1778 = vunpack.c.l.b16 %v1630
    %v1779 = vunpack.c.h.b16 %v1630
    %v1780 = vunpack.c.l.b16 %v1631
    %v1781 = vunpack.c.h.b16 %v1631
    %v1782 = vunpack.c.l.b16 %v1632
    %v1783 = vunpack.c.h.b16 %v1632
    %v1784 = vunpack.c.l.b16 %v1633
    %v1785 = vunpack.c.h.b16 %v1633
    %v1786 = vunpack.c.l.b16 %v1634
    %v1787 = vunpack.c.h.b16 %v1634
    %v1788 = vunpack.c.l.b16 %v1635
    %v1789 = vunpack.c.h.b16 %v1635
    %v1790 = vunpack.c.l.b16 %v1636
    %v1791 = vunpack.c.h.b16 %v1636
    %v1792 = vunpack.c.l.b16 %v1637
    %v1793 = vunpack.c.h.b16 %v1637
    %v1794 = vunpack.c.l.b16 %v1638
    %v1795 = vunpack.c.h.b16 %v1638
    %v1796 = vunpack.c.l.b16 %v1639
    %v1797 = vunpack.c.h.b16 %v1639
    %v1798 = vunpack.c.l.b16 %v1640
    %v1799 = vunpack.c.h.b16 %v1640
    %v1800 = vunpack.c.l.b16 %v1641
    %v1801 = vunpack.c.h.b16 %v1641
    %v1802 = vunpack.c.l.b16 %v1642
    %v1803 = vunpack.c.h.b16 %v1642
    %v1804 = vunpack.c.l.b16 %v1643
    %v1805 = vunpack.c.h.b16 %v1643
    %v1806 = vunpack.c.l.b16 %v1644
    %v1807 = vunpack.c.h.b16 %v1644
    %v1808 = vunpack.c.l.b16 %v1645
    %v1809 = vunpack.c.h.b16 %v1645
    %v1810 = vunpack.c.l.b16 %v1646
    %v1811 = vunpack.c.h.b16 %v1646
    %v1812 = vunpack.c.l.b16 %v1647
    %v1813 = vunpack.c.h.b16 %v1647
    %v1814 = vunpack.c.l.b16 %v1648
    %v1815 = vunpack.c.h.b16 %v1648
    %v1816 = vunpack.c.l.b16 %v1649
    %v1817 = vunpack.c.h.b16 %v1649
    %v1818 = vunpack.c.l.b16 %v1650
    %v1819 = vunpack.c.h.b16 %v1650
    %v1820 = vunpack.c.l.b16 %v1651
    %v1821 = vunpack.c.h.b16 %v1651
    %v1822 = vunpack.c.l.b16 %v1652
    %v1823 = vunpack.c.h.b16 %v1652
    %v1824 = vunpack.c.l.b16 %v1653
    %v1825 = vunpack.c.h.b16 %v1653
    %v1826 = vunpack.c.l.b16 %v1654
    %v1827 = vunpack.c.h.b16 %v1654
    %v1828 = vunpack.c.l.b16 %v1655
    %v1829 = vunpack.c.h.b16 %v1655
    %v1830 = vunpack.c.l.b16 %v1656
    %v1831 = vunpack.c.h.b16 %v1656
    %v1832 = vunpack.c.l.b16 %v1657
    %v1833 = vunpack.c.h.b16 %v1657
    %v1834 = vunpack.c.l.b16 %v1658
    %v1835 = vunpack.c.h.b16 %v1658
    %v1836 = vunpack.c.l.b16 %v1659
    %v1837 = vunpack.c.h.b16 %v1659
    %v1838 = vunpack.c.l.b16 %v1660
    %v1839 = vunpack.c.h.b16 %v1660
    %v1840 = vunpack.c.l.b16 %v1661
    %v1841 = vunpack.c.h.b16 %v1661
    %v1842 = vunpack.c.l.b16 %v1662
    %v1843 = vunpack.c.h.b16 %v1662
    %v1844 = vunpack.c.l.b16 %v1663
    %v1845 = vunpack.c.h.b16 %v1663
    %v1846 = vunpack.c.l.b16 %v1664
    %v1847 = vunpack.c.h.b16 %v1664
    %v1848 = vunpack.c.l.b16 %v1665
    %v1849 = vunpack.c.h.b16 %v1665
    %v1850 = vunpack.c.l.b16 %v1666
    %v1851 = vunpack.c.h.b16 %v1666
    %v1852 = vunpack.c.l.b16 %v1667
    %v1853 = vunpack.c.h.b16 %v1667
    %v1854 = vunpack.c.l.b16 %v1668
    %v1855 = vunpack.c.h.b16 %v1668
    %v1856 = vunpack.c.l.b16 %v1669
    %v1857 = vunpack.c.h.b16 %v1669
    %v1858 = vunpack.c.l.b16 %v1670
    %v1859 = vunpack.c.h.b16 %v1670
    %v1860 = vunpack.c.l.b16 %v1671
    %v1861 = vunpack.c.h.b16 %v1671
    %v1862 = vunpack.c.l.b16 %v1672
    %v1863 = vunpack.c.h.b16 %v1672
    %v1864 = vunpack.c.l.b16 %v1673
    %v1865 = vunpack.c.h.b16 %v1673
    %v1866 = vunpack.c.l.b16 %v1674
    %v1867 = vunpack.c.h.b16 %v1674
    %v1868 = vunpack.c.l.b16 %v1675
    %v1869 = vunpack.c.h.b16 %v1675
    %v1870 = vunpack.c.l.b16 %v1676
    %v1871 = vunpack.c.h.b16 %v1676
    %v1872 = vunpack.c.l.b16 %v1677
    %v1873 = vunpack.c.h.b16 %v1677
    %v1874 = vunpack.c.l.b16 %v1678
    %v1875 = vunpack.c.h.b16 %v1678
    %v1876 = vunpack.c.l.b16 %v1679
    %v1877 = vunpack.c.h.b16 %v1679
    %v1878 = vpack.c.b16 %v1752, %v1750
    %v1879 = vpack.c.b16 %v1753, %v1751
    %v1880 = vpack.c.b16 %v1756, %v1754
    %v1881 = vpack.c.b16 %v1757, %v1755
    %v1882 = vpack.c.b16 %v1760, %v1758
    %v1883 = vpack.c.b16 %v1761, %v1759
    %v1884 = vpack.c.b16 %v1764, %v1762
    %v1885 = vpack.c.b16 %v1765, %v1763
    %v1886 = vpack.c.b16 %v1768, %v1766
    %v1887 = vpack.c.b16 %v1769, %v1767
    %v1888 = vpack.c.b16 %v1772, %v1770
    %v1889 = vpack.c.b16 %v1773, %v1771
    %v1890 = vpack.c.b16 %v1776, %v1774
    %v1891 = vpack.c.b16 %v1777, %v1775
    %v1892 = vpack.c.b16 %v1780, %v1778
    %v1893 = vpack.c.b16 %v1781, %v1779
    %v1894 = vpack.c.b16 %v1784, %v1782
    %v1895 = vpack.c.b16 %v1785, %v1783
    %v1896 = vpack.c.b16 %v1788, %v1786
    %v1897 = vpack.c.b16 %v1789, %v1787
    %v1898 = vpack.c.b16 %v1792, %v1790
    %v1899 = vpack.c.b16 %v1793, %v1791
    %v1900 = vpack.c.b16 %v1796, %v1794
    %v1901 = vpack.c.b16 %v1797, %v1795
    %v1902 = vpack.c.b16 %v1800, %v1798
    %v1903 = vpack.c.b16 %v1801, %v1799
    %v1904 = vpack.c.b16 %v1804, %v1802
    %v1905 = vpack.c.b16 %v1805, %v1803
    %v1906 = vpack.c.b16 %v1808, %v1806
    %v1907 = vpack.c.b16 %v1809, %v1807
    %v1908 = vpack.c.b16 %v1812, %v1810
    %v1909 = vpack.c.b16 %v1813, %v1811
    %v1910 = vpack.c.b16 %v1816, %v1814
    %v1911 = vpack.c.b16 %v1817, %v1815
    %v1912 = vpack.c.b16 %v1820, %v1818
    %v1913 = vpack.c.b16 %v1821, %v1819
    %v1914 = vpack.c.b16 %v1824, %v1822
    %v1915 = vpack.c.b16 %v1825, %v1823
    %v1916 = vpack.c.b16 %v1828, %v1826
    %v1917 = vpack.c.b16 %v1829, %v1827
    %v1918 = vpack.c.b16 %v1832, %v1830
    %v1919 = vpack.c.b16 %v1833, %v1831
    %v1920 = vpack.c.b16 %v1836, %v1834
    %v1921 = vpack.c.b16 %v1837, %v1835
    %v1922 = vpack.c.b16 %v1840, %v1838
    %v1923 = vpack.c.b16 %v1841, %v1839
    %v1924 = vpack.c.b16 %v1844, %v1842
    %v1925 = vpack.c.b16 %v1845, %v1843
    %v1926 = vpack.c.b16 %v1848, %v1846
    %v1927 = vpack.c.b16 %v1849, %v1847
    %v1928 = vpack.c.b16 %v1852, %v1850
    %v1929 = vpack.c.b16 %v1853, %v1851
    %v1930 = vpack.c.b16 %v1856, %v1854
    %v1931 = vpack.c.b16 %v1857, %v1855
    %v1932 = vpack.c.b16 %v1860, %v1858
    %v1933 = vpack.c.b16 %v1861, %v1859
    %v1934 = vpack.c.b16 %v1864, %v1862
    %v1935 = vpack.c.b16 %v1865, %v1863
    %v1936 = vpack.c.b16 %v1868, %v1866
    %v1937 = vpack.c.b16 %v1869, %v1867
    %v1938 = vpack.c.b16 %v1872, %v1870
    %v1939 = vpack.c.b16 %v1873, %v1871
    %v1940 = vpack.c.b16 %v1876, %v1874
    %v1941 = vpack.c.b16 %v1877, %v1875
    %2006 = vmatpush.bf16.msra.mxu0 %v1892
    %2007 = vmatpush.bf16.msra.mxu0 %v1890
    %2008 = vmatpush.bf16.msra.mxu0 %v1888
    %2009 = vmatpush.bf16.msra.mxu0 %v1886
    %2010 = vmatpush.bf16.msra.mxu0 %v1884
    %2011 = vmatpush.bf16.msra.mxu0 %v1882
    %2012 = vmatpush.bf16.msra.mxu0 %v1880
    %2013 = vmatpush.bf16.msra.mxu0 %v1878
    %2014 = vmatmul.bf16.gmra.mxu0 %v1612
    %v2015 = vpop.f32.mrf.mxu0
    %v2016 = vadd.f32 %v1682, %v2015
    %v2017 = vpop.f32.mrf.mxu0
    %2018 = vdwg.mxu0
    %2019 = vmatpush.bf16.msra.mxu0 %v1908
    %2020 = vmatpush.bf16.msra.mxu0 %v1906
    %2021 = vmatpush.bf16.msra.mxu0 %v1904
    %2022 = vmatpush.bf16.msra.mxu0 %v1902
    %2023 = vmatpush.bf16.msra.mxu0 %v1900
    %2024 = vmatpush.bf16.msra.mxu0 %v1898
    %2025 = vmatpush.bf16.msra.mxu0 %v1896
    %2026 = vmatpush.bf16.msra.mxu0 %v1894
    %2027 = vmatmul.bf16.gmra.mxu0 %v1613
    %v2028 = vpop.f32.mrf.mxu0
    %v2029 = vadd.f32 %v2016, %v2028
    %v2030 = vpop.f32.mrf.mxu0
    %2031 = vdwg.mxu0
    %2032 = vmatpush.bf16.msra.mxu0 %v1924
    %2033 = vmatpush.bf16.msra.mxu0 %v1922
    %2034 = vmatpush.bf16.msra.mxu0 %v1920
    %2035 = vmatpush.bf16.msra.mxu0 %v1918
    %2036 = vmatpush.bf16.msra.mxu0 %v1916
    %2037 = vmatpush.bf16.msra.mxu0 %v1914
    %2038 = vmatpush.bf16.msra.mxu0 %v1912
    %2039 = vmatpush.bf16.msra.mxu0 %v1910
    %2040 = vmatmul.bf16.gmra.mxu0 %v1614
    %v2041 = vpop.f32.mrf.mxu0
    %v2042 = vadd.f32 %v2029, %v2041
    %v2043 = vpop.f32.mrf.mxu0
    %2044 = vdwg.mxu0
    %2045 = vmatpush.bf16.msra.mxu0 %v1940
    %2046 = vmatpush.bf16.msra.mxu0 %v1938
    %2047 = vmatpush.bf16.msra.mxu0 %v1936
    %2048 = vmatpush.bf16.msra.mxu0 %v1934
    %2049 = vmatpush.bf16.msra.mxu0 %v1932
    %2050 = vmatpush.bf16.msra.mxu0 %v1930
    %2051 = vmatpush.bf16.msra.mxu0 %v1928
    %2052 = vmatpush.bf16.msra.mxu0 %v1926
    %2053 = vmatmul.bf16.gmra.mxu0 %v1615
    %v2054 = vpop.f32.mrf.mxu0
    %v2055 = vadd.f32 %v2042, %v2054
    %v2056 = vpop.f32.mrf.mxu0
    %2057 = vdwg.mxu0
    %2058 = vmatpush.bf16.msra.mxu0 %v1893
    %2059 = vmatpush.bf16.msra.mxu0 %v1891
    %2060 = vmatpush.bf16.msra.mxu0 %v1889
    %2061 = vmatpush.bf16.msra.mxu0 %v1887
    %2062 = vmatpush.bf16.msra.mxu0 %v1885
    %2063 = vmatpush.bf16.msra.mxu0 %v1883
    %2064 = vmatpush.bf16.msra.mxu0 %v1881
    %2065 = vmatpush.bf16.msra.mxu0 %v1879
    %2066 = vmatmul.bf16.gmra.mxu0 %v1612
    %v2067 = vpop.f32.mrf.mxu0
    %v2068 = vadd.f32 %v1683, %v2067
    %v2069 = vpop.f32.mrf.mxu0
    %2070 = vdwg.mxu0
    %2071 = vmatpush.bf16.msra.mxu0 %v1909
    %2072 = vmatpush.bf16.msra.mxu0 %v1907
    %2073 = vmatpush.bf16.msra.mxu0 %v1905
    %2074 = vmatpush.bf16.msra.mxu0 %v1903
    %2075 = vmatpush.bf16.msra.mxu0 %v1901
    %2076 = vmatpush.bf16.msra.mxu0 %v1899
    %2077 = vmatpush.bf16.msra.mxu0 %v1897
    %2078 = vmatpush.bf16.msra.mxu0 %v1895
    %2079 = vmatmul.bf16.gmra.mxu0 %v1613
    %v2080 = vpop.f32.mrf.mxu0
    %v2081 = vadd.f32 %v2068, %v2080
    %v2082 = vpop.f32.mrf.mxu0
    %2083 = vdwg.mxu0
    %2084 = vmatpush.bf16.msra.mxu0 %v1925
    %2085 = vmatpush.bf16.msra.mxu0 %v1923
    %2086 = vmatpush.bf16.msra.mxu0 %v1921
    %2087 = vmatpush.bf16.msra.mxu0 %v1919
    %2088 = vmatpush.bf16.msra.mxu0 %v1917
    %2089 = vmatpush.bf16.msra.mxu0 %v1915
    %2090 = vmatpush.bf16.msra.mxu0 %v1913
    %2091 = vmatpush.bf16.msra.mxu0 %v1911
    %2092 = vmatmul.bf16.gmra.mxu0 %v1614
    %v2093 = vpop.f32.mrf.mxu0
    %v2094 = vadd.f32 %v2081, %v2093
    %v2095 = vpop.f32.mrf.mxu0
    %2096 = vdwg.mxu0
    %2097 = vmatpush.bf16.msra.mxu0 %v1941
    %2098 = vmatpush.bf16.msra.mxu0 %v1939
    %2099 = vmatpush.bf16.msra.mxu0 %v1937
    %2100 = vmatpush.bf16.msra.mxu0 %v1935
    %2101 = vmatpush.bf16.msra.mxu0 %v1933
    %2102 = vmatpush.bf16.msra.mxu0 %v1931
    %2103 = vmatpush.bf16.msra.mxu0 %v1929
    %2104 = vmatpush.bf16.msra.mxu0 %v1927
    %2105 = vmatmul.bf16.gmra.mxu0 %v1615
    %v2106 = vpop.f32.mrf.mxu0
    %v2107 = vadd.f32 %v2094, %v2106
    %v2108 = vpop.f32.mrf.mxu0
    %2109 = vdwg.mxu0
    %v2110 = vmax.f32 %v2055, 0.0
    %v2111 = vmax.f32 %v2107, 0.0
    %v2112 = vpack.c.bf16 %v2110, %v2110
    %v2113 = vpack.c.bf16 %v2111, %v2111
    %v2114 = vld [vmem:[%s5] sm:$0xf]
    %v2115 = vld [vmem:[%s5 + $0x4] sm:$0xf]
    %v2116 = vld [vmem:[%s5 + $0x8] sm:$0xf]
    %v2117 = vld [vmem:[%s5 + $0xc] sm:$0xf]
    %v2118 = vld [vmem:[%s5 + $0x10] sm:$0xf]
    %v2119 = vld [vmem:[%s5 + $0x14] sm:$0xf]
    %v2120 = vld [vmem:[%s5 + $0x18] sm:$0xf]
    %v2121 = vld [vmem:[%s5 + $0x1c] sm:$0xf]
    %v2122 = vld [vmem:[%s5 + $0x20] sm:$0xf]
    %v2123 = vld [vmem:[%s5 + $0x24] sm:$0xf]
    %v2124 = vld [vmem:[%s5 + $0x28] sm:$0xf]
    %v2125 = vld [vmem:[%s5 + $0x2c] sm:$0xf]
    %v2126 = vld [vmem:[%s5 + $0x30] sm:$0xf]
    %v2127 = vld [vmem:[%s5 + $0x34] sm:$0xf]
    %v2128 = vld [vmem:[%s5 + $0x38] sm:$0xf]
    %v2129 = vld [vmem:[%s5 + $0x3c] sm:$0xf]
    %v2130 = vld [vmem:[%s5 + $0x40] sm:$0xf]
    %v2131 = vld [vmem:[%s5 + $0x44] sm:$0xf]
    %v2132 = vld [vmem:[%s5 + $0x48] sm:$0xf]
    %v2133 = vld [vmem:[%s5 + $0x4c] sm:$0xf]
    %v2134 = vld [vmem:[%s5 + $0x50] sm:$0xf]
    %v2135 = vld [vmem:[%s5 + $0x54] sm:$0xf]
    %v2136 = vld [vmem:[%s5 + $0x58] sm:$0xf]
    %v2137 = vld [vmem:[%s5 + $0x5c] sm:$0xf]
    %v2138 = vld [vmem:[%s5 + $0x60] sm:$0xf]
    %v2139 = vld [vmem:[%s5 + $0x64] sm:$0xf]
    %v2140 = vld [vmem:[%s5 + $0x68] sm:$0xf]
    %v2141 = vld [vmem:[%s5 + $0x6c] sm:$0xf]
    %v2142 = vld [vmem:[%s5 + $0x70] sm:$0xf]
    %v2143 = vld [vmem:[%s5 + $0x74] sm:$0xf]
    %v2144 = vld [vmem:[%s5 + $0x78] sm:$0xf]
    %v2145 = vld [vmem:[%s5 + $0x7c] sm:$0xf]
    %v2146 = vld [vmem:[%s6] sm:$0x1]
    %v2148 = vperm.slane %v2146, 0
    %v2182 = vunpack.c.l.b16 %v2114
    %v2183 = vunpack.c.l.b16 %v2115
    %v2184 = vunpack.c.l.b16 %v2116
    %v2185 = vunpack.c.l.b16 %v2117
    %v2186 = vunpack.c.l.b16 %v2118
    %v2187 = vunpack.c.l.b16 %v2119
    %v2188 = vunpack.c.l.b16 %v2120
    %v2189 = vunpack.c.l.b16 %v2121
    %v2190 = vunpack.c.l.b16 %v2122
    %v2191 = vunpack.c.l.b16 %v2123
    %v2192 = vunpack.c.l.b16 %v2124
    %v2193 = vunpack.c.l.b16 %v2125
    %v2194 = vunpack.c.l.b16 %v2126
    %v2195 = vunpack.c.l.b16 %v2127
    %v2196 = vunpack.c.l.b16 %v2128
    %v2197 = vunpack.c.l.b16 %v2129
    %v2198 = vunpack.c.l.b16 %v2130
    %v2199 = vunpack.c.l.b16 %v2131
    %v2200 = vunpack.c.l.b16 %v2132
    %v2201 = vunpack.c.l.b16 %v2133
    %v2202 = vunpack.c.l.b16 %v2134
    %v2203 = vunpack.c.l.b16 %v2135
    %v2204 = vunpack.c.l.b16 %v2136
    %v2205 = vunpack.c.l.b16 %v2137
    %v2206 = vunpack.c.l.b16 %v2138
    %v2207 = vunpack.c.l.b16 %v2139
    %v2208 = vunpack.c.l.b16 %v2140
    %v2209 = vunpack.c.l.b16 %v2141
    %v2210 = vunpack.c.l.b16 %v2142
    %v2211 = vunpack.c.l.b16 %v2143
    %v2212 = vunpack.c.l.b16 %v2144
    %v2213 = vunpack.c.l.b16 %v2145
    %v2214 = vpack.c.b16 %v2183, %v2182
    %v2215 = vpack.c.b16 %v2185, %v2184
    %v2216 = vpack.c.b16 %v2187, %v2186
    %v2217 = vpack.c.b16 %v2189, %v2188
    %v2218 = vpack.c.b16 %v2191, %v2190
    %v2219 = vpack.c.b16 %v2193, %v2192
    %v2220 = vpack.c.b16 %v2195, %v2194
    %v2221 = vpack.c.b16 %v2197, %v2196
    %v2222 = vpack.c.b16 %v2199, %v2198
    %v2223 = vpack.c.b16 %v2201, %v2200
    %v2224 = vpack.c.b16 %v2203, %v2202
    %v2225 = vpack.c.b16 %v2205, %v2204
    %v2226 = vpack.c.b16 %v2207, %v2206
    %v2227 = vpack.c.b16 %v2209, %v2208
    %v2228 = vpack.c.b16 %v2211, %v2210
    %v2229 = vpack.c.b16 %v2213, %v2212
    %2246 = vmatpush.bf16.msra.mxu0 %v2221
    %2247 = vmatpush.bf16.msra.mxu0 %v2220
    %2248 = vmatpush.bf16.msra.mxu0 %v2219
    %2249 = vmatpush.bf16.msra.mxu0 %v2218
    %2250 = vmatpush.bf16.msra.mxu0 %v2217
    %2251 = vmatpush.bf16.msra.mxu0 %v2216
    %2252 = vmatpush.bf16.msra.mxu0 %v2215
    %2253 = vmatpush.bf16.msra.mxu0 %v2214
    %2254 = vmatmul.bf16.gmra.mxu0 %v2112
    %v2255 = vpop.f32.mrf.mxu0
    %v2256 = vadd.f32 %v2148, %v2255
    %v2257 = vpop.f32.mrf.mxu0
    %2258 = vdwg.mxu0
    %2259 = vmatpush.bf16.msra.mxu0 %v2229
    %2260 = vmatpush.bf16.msra.mxu0 %v2228
    %2261 = vmatpush.bf16.msra.mxu0 %v2227
    %2262 = vmatpush.bf16.msra.mxu0 %v2226
    %2263 = vmatpush.bf16.msra.mxu0 %v2225
    %2264 = vmatpush.bf16.msra.mxu0 %v2224
    %2265 = vmatpush.bf16.msra.mxu0 %v2223
    %2266 = vmatpush.bf16.msra.mxu0 %v2222
    %2267 = vmatmul.bf16.gmra.mxu0 %v2113
    %v2268 = vpop.f32.mrf.mxu0
    %v2269 = vadd.f32 %v2256, %v2268
    %v2270 = vpop.f32.mrf.mxu0
    %2271 = vdwg.mxu0
    %v2272 = vmax.f32 %v2269, 0.0
    %v2273 = vpack.c.bf16 %v2272, %v2272
    %v2274 = vld [vmem:[%s7] sm:$0xf]
    %v2275 = vld [vmem:[%s7 + $0x4] sm:$0xf]
    %v2276 = vld [vmem:[%s7 + $0x8] sm:$0xf]
    %v2277 = vld [vmem:[%s7 + $0xc] sm:$0xf]
    %v2278 = vld [vmem:[%s7 + $0x10] sm:$0xf]
    %v2279 = vld [vmem:[%s7 + $0x14] sm:$0xf]
    %v2280 = vld [vmem:[%s7 + $0x18] sm:$0xf]
    %v2281 = vld [vmem:[%s7 + $0x1c] sm:$0xf]
    %v2282 = vld [vmem:[%s7 + $0x20] sm:$0xf]
    %v2283 = vld [vmem:[%s7 + $0x24] sm:$0xf]
    %v2284 = vld [vmem:[%s7 + $0x28] sm:$0xf]
    %v2285 = vld [vmem:[%s7 + $0x2c] sm:$0xf]
    %v2286 = vld [vmem:[%s7 + $0x30] sm:$0xf]
    %v2287 = vld [vmem:[%s7 + $0x34] sm:$0xf]
    %v2288 = vld [vmem:[%s7 + $0x38] sm:$0xf]
    %v2289 = vld [vmem:[%s7 + $0x3c] sm:$0xf]
    %v2290 = vld [vmem:[%s8] sm:$0x1]
    %v2292 = vperm.slane %v2290, 0
    %v2310 = vunpack.c.l.b16 %v2274
    %v2311 = vunpack.c.l.b16 %v2275
    %v2312 = vunpack.c.l.b16 %v2276
    %v2313 = vunpack.c.l.b16 %v2277
    %v2314 = vunpack.c.l.b16 %v2278
    %v2315 = vunpack.c.l.b16 %v2279
    %v2316 = vunpack.c.l.b16 %v2280
    %v2317 = vunpack.c.l.b16 %v2281
    %v2318 = vunpack.c.l.b16 %v2282
    %v2319 = vunpack.c.l.b16 %v2283
    %v2320 = vunpack.c.l.b16 %v2284
    %v2321 = vunpack.c.l.b16 %v2285
    %v2322 = vunpack.c.l.b16 %v2286
    %v2323 = vunpack.c.l.b16 %v2287
    %v2324 = vunpack.c.l.b16 %v2288
    %v2325 = vunpack.c.l.b16 %v2289
    %v2326 = vpack.c.b16 %v2311, %v2310
    %v2327 = vpack.c.b16 %v2313, %v2312
    %v2328 = vpack.c.b16 %v2315, %v2314
    %v2329 = vpack.c.b16 %v2317, %v2316
    %v2330 = vpack.c.b16 %v2319, %v2318
    %v2331 = vpack.c.b16 %v2321, %v2320
    %v2332 = vpack.c.b16 %v2323, %v2322
    %v2333 = vpack.c.b16 %v2325, %v2324
    %2342 = vmatpush.bf16.msra.mxu0 %v2333
    %2343 = vmatpush.bf16.msra.mxu0 %v2332
    %2344 = vmatpush.bf16.msra.mxu0 %v2331
    %2345 = vmatpush.bf16.msra.mxu0 %v2330
    %2346 = vmatpush.bf16.msra.mxu0 %v2329
    %2347 = vmatpush.bf16.msra.mxu0 %v2328
    %2348 = vmatpush.bf16.msra.mxu0 %v2327
    %2349 = vmatpush.bf16.msra.mxu0 %v2326
    %2350 = vmatmul.bf16.gmra.mxu0 %v2273
    %v2351 = vpop.f32.mrf.mxu0
    %v2352 = vadd.f32 %v2292, %v2351
    %v2353 = vpop.f32.mrf.mxu0
    %2354 = vdwg.mxu0
    %v2355 = vmax.f32 %v2352, 0.0
    %v2356 = vpack.c.bf16 %v2355, %v2355
    %v2357 = vld [vmem:[%s9] sm:$0xf]
    %v2358 = vld [vmem:[%s9 + $0x4] sm:$0xf]
    %v2359 = vld [vmem:[%s9 + $0x8] sm:$0xf]
    %v2360 = vld [vmem:[%s9 + $0xc] sm:$0xf]
    %v2361 = vld [vmem:[%s9 + $0x10] sm:$0xf]
    %v2362 = vld [vmem:[%s9 + $0x14] sm:$0xf]
    %v2363 = vld [vmem:[%s9 + $0x18] sm:$0xf]
    %v2364 = vld [vmem:[%s9 + $0x1c] sm:$0xf]
    %v2365 = vld [vmem:[%s9 + $0x20] sm:$0xf]
    %v2366 = vld [vmem:[%s9 + $0x24] sm:$0xf]
    %v2367 = vld [vmem:[%s9 + $0x28] sm:$0xf]
    %v2368 = vld [vmem:[%s9 + $0x2c] sm:$0xf]
    %v2369 = vld [vmem:[%s9 + $0x30] sm:$0xf]
    %v2370 = vld [vmem:[%s9 + $0x34] sm:$0xf]
    %v2371 = vld [vmem:[%s9 + $0x38] sm:$0xf]
    %v2372 = vld [vmem:[%s9 + $0x3c] sm:$0xf]
    %v2373 = vld [vmem:[%s10] sm:$0x1]
    %v2375 = vperm.slane %v2373, 0
    %v2393 = vunpack.c.l.b16 %v2357
    %v2394 = vunpack.c.l.b16 %v2358
    %v2395 = vunpack.c.l.b16 %v2359
    %v2396 = vunpack.c.l.b16 %v2360
    %v2397 = vunpack.c.l.b16 %v2361
    %v2398 = vunpack.c.l.b16 %v2362
    %v2399 = vunpack.c.l.b16 %v2363
    %v2400 = vunpack.c.l.b16 %v2364
    %v2401 = vunpack.c.l.b16 %v2365
    %v2402 = vunpack.c.l.b16 %v2366
    %v2403 = vunpack.c.l.b16 %v2367
    %v2404 = vunpack.c.l.b16 %v2368
    %v2405 = vunpack.c.l.b16 %v2369
    %v2406 = vunpack.c.l.b16 %v2370
    %v2407 = vunpack.c.l.b16 %v2371
    %v2408 = vunpack.c.l.b16 %v2372
    %v2409 = vpack.c.b16 %v2394, %v2393
    %v2410 = vpack.c.b16 %v2396, %v2395
    %v2411 = vpack.c.b16 %v2398, %v2397
    %v2412 = vpack.c.b16 %v2400, %v2399
    %v2413 = vpack.c.b16 %v2402, %v2401
    %v2414 = vpack.c.b16 %v2404, %v2403
    %v2415 = vpack.c.b16 %v2406, %v2405
    %v2416 = vpack.c.b16 %v2408, %v2407
    %2425 = vmatpush.bf16.msra.mxu0 %v2416
    %2426 = vmatpush.bf16.msra.mxu0 %v2415
    %2427 = vmatpush.bf16.msra.mxu0 %v2414
    %2428 = vmatpush.bf16.msra.mxu0 %v2413
    %2429 = vmatpush.bf16.msra.mxu0 %v2412
    %2430 = vmatpush.bf16.msra.mxu0 %v2411
    %2431 = vmatpush.bf16.msra.mxu0 %v2410
    %2432 = vmatpush.bf16.msra.mxu0 %v2409
    %2433 = vmatmul.bf16.gmra.mxu0 %v2356
    %v2434 = vpop.f32.mrf.mxu0
    %v2435 = vadd.f32 %v2375, %v2434
    %v2436 = vpop.f32.mrf.mxu0
    %2437 = vdwg.mxu0
    %2438 = vmax.xlane.f32.xlu0 %v2435
    %v2439 = vpop.xlane.xlu0 %2438
    %v2440 = vsub.f32 %v2435, %v2439
    %v2441 = vmul.f32 %v2440, 1.442695
    %v2442 = vpow.pop %v2441
    %2443 = vadd.xlane.f32.xlu0 %v2442
    %v2444 = vpop.xlane.xlu0 %2443
    %v2445 = vlog2.pop %v2444
    %v2446 = vmul.f32 %v2445, 0.6931472
    %v2447 = vsub.f32 %v2440, %v2446
    %2448 = vst [vmem:[#allocation2] sm:$0xff] %v2447
    // Predicated region
    $region46: #{mlp_forward.1} parent=1 // pred_check
      _
    $region47: #{mlp_forward.1} parent=1 // pred_check_branch
      %2450 = sbr.rel (0) target = $region49
    $region48: #{mlp_forward.1} parent=1 // pred_region
      %2452 = vsyncadd [#allocation3], 0
      %s2454 = sshll.u32 [#allocation2], 4
      %s2455 = int_to_ptr.vmem [resolvable:$true] %s2454
      %s2456 = sshll.u32 %s11, 4
      %s2457 = int_to_ptr.hbm [resolvable:$true] %s2456
      %2459 = dma.vmem_to_hbm [thread:$0]  %s2455, 128, %s2457, [#allocation3]
    $region49: #{mlp_forward.1} parent=1 // pred_fallthru
      _
    // Predicated region
    $region50: #{mlp_forward.1} parent=1 // pred_check
      _
    $region51: #{mlp_forward.1} parent=1 // pred_check_branch
      %2461 = sbr.rel (0) target = $region53
    $region52: #{mlp_forward.1} parent=1 // pred_region
      %2463 = dma.done [#allocation3], 128
    $region53: #{mlp_forward.1} parent=1 // pred_fallthru
      _
    %2464 = vsyncpa [#allocation3], 1

</llo_original>
